<compile_context>
chip_gen: v7x
topology: tpu7x:2x2x1
jax: 0.10.0
libtpu: 0.0.40
codegen_flags: <defaults>
</compile_context>

<pallas_src>
import jax
import jax.numpy as jnp
from jax.experimental import pallas as pl
from jax.experimental.pallas import tpu as pltpu


def _se_conv1x1_kernel(gate_ref, x_ref, w_ref, o_ref):
    # gate_ref: (1, C_in) f32       x_ref: (1, C_in, HW)
    # w_ref:    (C_out, C_in)       o_ref: (1, C_out, HW)
    gate = jax.nn.sigmoid(gate_ref[...])                   # (1, C_in)  EUP/VPU, f32
    # Fold the per-channel gate into the weight; C_in is the lane axis of w.
    w_scaled = (w_ref[...] * gate).astype(x_ref.dtype)     # (C_out, C_in)
    out = jnp.dot(w_scaled, x_ref[0],                      # MXU: (C_out,C_in)@(C_in,HW)
                  preferred_element_type=jnp.float32)
    o_ref[0] = out.astype(o_ref.dtype)


def sigmoid_mul_conv1x1(x_gate, x_feat, weight, *, compute_dtype=None):
    """Fused sigmoid(x_gate) * x_feat followed by a 1x1 conv (no bias).

    x_gate: (N, C_in, 1, 1); x_feat: (N, C_in, H, W); weight: (C_out, C_in, 1, 1).
    Returns (N, C_out, H, W) in x_feat.dtype.
    compute_dtype: optionally cast x_feat / weight (e.g. jnp.bfloat16) before the
    kernel; the op is HBM-bound so this roughly halves the bytes moved and uses
    the native bf16 MXU path.
    """
    N, C_in, H, W = x_feat.shape
    C_out = weight.shape[0]
    HW = H * W
    out_dtype = x_feat.dtype

    # Free reshapes only -- no transposes, no extra HBM passes outside the kernel.
    x_m = x_feat.reshape(N, C_in, HW)                       # native NCHW, contiguous
    g_m = x_gate.reshape(N, C_in).astype(jnp.float32)       # tiny; keep f32 sigmoid
    w_m = weight.reshape(C_out, C_in)                       # native layout = matmul LHS

    if compute_dtype is not None:
        x_m = x_m.astype(compute_dtype)
        w_m = w_m.astype(compute_dtype)

    out = pl.pallas_call(
        _se_conv1x1_kernel,
        out_shape=jax.ShapeDtypeStruct((N, C_out, HW), out_dtype),
        grid_spec=pltpu.PrefetchScalarGridSpec(
            num_scalar_prefetch=0,
            # Single step per batch element: this op is overhead/HBM-bound, so we
            # deliberately do NOT split HW / C_in / C_out (each grid step costs
            # ~0.35 us of pure overhead on a serial TPU grid).
            grid=(N,),
            in_specs=[
                pl.BlockSpec((1, C_in), lambda n: (n, 0)),
                pl.BlockSpec((1, C_in, HW), lambda n: (n, 0, 0)),
                pl.BlockSpec((C_out, C_in), lambda n: (0, 0)),   # weight resident
            ],
            out_specs=pl.BlockSpec((1, C_out, HW), lambda n: (n, 0, 0)),
        ),
        compiler_params=pltpu.CompilerParams(
            dimension_semantics=("parallel",)),
    )(g_m, x_m, w_m)

    # Free reshape back to NCHW (no data movement).
    return out.reshape(N, C_out, H, W)


if __name__ == "__main__":
    # Shapes fixed by the module: x427 (1,1344,1,1), x423 (1,1344,14,14),
    # Conv2d(1344, 224, kernel_size=1, bias=False).
    N, C_in, C_out, H, W = 1, 1344, 224, 14, 14

    key = jax.random.PRNGKey(0)
    k_gate, k_feat, k_w = jax.random.split(key, 3)

    x_gate = jax.random.normal(k_gate, (N, C_in, 1, 1), dtype=jnp.float32)
    x_feat = jax.random.normal(k_feat, (N, C_in, H, W), dtype=jnp.float32)
    # Deterministic kaiming-uniform-ish init for the Conv2d weight (bias=False).
    bound = (1.0 / C_in) ** 0.5
    weight = jax.random.uniform(k_w, (C_out, C_in, 1, 1),
                                minval=-bound, maxval=bound,
                                dtype=jnp.float32)

    # Pure-JAX reference of the module's math.
    ref = jnp.einsum(
        "oc,nchw->nohw",
        weight.reshape(C_out, C_in),
        jax.nn.sigmoid(x_gate) * x_feat,
    )

    # f32 path (matches the PyTorch module's dtype semantics).
    y = jax.block_until_ready(sigmoid_mul_conv1x1(x_gate, x_feat, weight))
    assert y.shape == (N, C_out, H, W)
    assert jnp.allclose(y, ref, atol=1e-4, rtol=1e-4)

    # bf16 compute path (HBM-bound op: halves the input bytes, native bf16 MXU).
    y_bf16 = jax.block_until_ready(
        sigmoid_mul_conv1x1(x_gate, x_feat, weight, compute_dtype=jnp.bfloat16))
    assert y_bf16.shape == (N, C_out, H, W)
    assert jnp.allclose(y_bf16.astype(jnp.float32), ref, atol=5e-2, rtol=5e-2)

    print("KERNEL_OK")
</pallas_src>

<mosaic_0001>
module attributes {stable_mosaic.version = 11 : i64} {
  func.func @_se_conv1x1_kernel(%arg0: i32, %arg1: memref<1x1344xf32, #tpu.memory_space<vmem>>, %arg2: memref<1x1344x196xf32, #tpu.memory_space<vmem>>, %arg3: memref<224x1344xf32, #tpu.memory_space<vmem>>, %arg4: memref<1x224x196xf32, #tpu.memory_space<vmem>>) attributes {dimension_semantics = [#tpu.dimension_semantics<parallel>], iteration_bounds = array<i64: 1>, scalar_prefetch = 0 : i64, scratch_operands = 0 : i64, tpu.core_type = #tpu.core_type<tc>, window_params = [{transform_indices = @transform_0, window_bounds = array<i64: 1, 1344>}, {transform_indices = @transform_1, window_bounds = array<i64: 1, 1344, 196>}, {pipeline_mode = #tpu.pipeline_mode<synchronous>, transform_indices = @transform_2, window_bounds = array<i64: 224, 1344>}, {transform_indices = @transform_3, window_bounds = array<i64: 1, 224, 196>}]} {
    %c0 = arith.constant 0 : index
    %c0_0 = arith.constant 0 : index
    %0 = vector.load %arg1[%c0, %c0_0] : memref<1x1344xf32, #tpu.memory_space<vmem>>, vector<1x1344xf32>
    %1 = arith.negf %0 : vector<1x1344xf32>
    %2 = math.exp %1 : vector<1x1344xf32>
    %cst = arith.constant 1.000000e+00 : f32
    %3 = vector.broadcast %cst : f32 to vector<1x1344xf32>
    %4 = arith.addf %3, %2 : vector<1x1344xf32>
    %5 = arith.divf %3, %4 : vector<1x1344xf32>
    %c0_1 = arith.constant 0 : index
    %c0_2 = arith.constant 0 : index
    %6 = vector.load %arg3[%c0_1, %c0_2] : memref<224x1344xf32, #tpu.memory_space<vmem>>, vector<224x1344xf32>
    %7 = vector.broadcast %5 : vector<1x1344xf32> to vector<224x1344xf32>
    %8 = arith.mulf %6, %7 : vector<224x1344xf32>
    %c0_3 = arith.constant 0 : index
    %c0_4 = arith.constant 0 : index
    %c0_5 = arith.constant 0 : index
    %9 = vector.load %arg2[%c0_3, %c0_4, %c0_5] : memref<1x1344x196xf32, #tpu.memory_space<vmem>>, vector<1x1344x196xf32>
    %10 = vector.shape_cast %9 : vector<1x1344x196xf32> to vector<1344x196xf32>
    %cst_6 = arith.constant dense<0.000000e+00> : vector<224x196xf32>
    %11 = tpu.matmul %8, %10, %cst_6 {dimension_numbers = #tpu.dot_dimension_numbers<[1], [0], [0], [1], [0, 0, 1, 1], [], []>} : vector<224x1344xf32>, vector<1344x196xf32>, vector<224x196xf32> -> vector<224x196xf32>
    %c0_7 = arith.constant 0 : index
    %c0_8 = arith.constant 0 : index
    %c0_9 = arith.constant 0 : index
    %12 = vector.load %arg4[%c0_7, %c0_8, %c0_9] : memref<1x224x196xf32, #tpu.memory_space<vmem>>, vector<1x224x196xf32>
    %13 = vector.shape_cast %12 : vector<1x224x196xf32> to vector<224x196xf32>
    %14 = vector.shape_cast %11 : vector<224x196xf32> to vector<1x224x196xf32>
    tpu.vector_store %arg4[%c0_7, %c0_8, %c0_9], %14 {strides = array<i32>} : memref<1x224x196xf32, #tpu.memory_space<vmem>>, vector<1x224x196xf32>,
    return
  }
  func.func @transform_0(%arg0: i32) -> (i32, i32) {
    %c0_i32 = arith.constant 0 : i32
    %c0_i32_0 = arith.constant 0 : i32
    return %arg0, %c0_i32 : i32, i32
  }
  func.func @transform_1(%arg0: i32) -> (i32, i32, i32) {
    %c0_i32 = arith.constant 0 : i32
    %c0_i32_0 = arith.constant 0 : i32
    %c0_i32_1 = arith.constant 0 : i32
    return %arg0, %c0_i32, %c0_i32_0 : i32, i32, i32
  }
  func.func @transform_2(%arg0: i32) -> (i32, i32) {
    %c0_i32 = arith.constant 0 : i32
    %c0_i32_0 = arith.constant 0 : i32
    %c0_i32_1 = arith.constant 0 : i32
    return %c0_i32, %c0_i32_0 : i32, i32
  }
  func.func @transform_3(%arg0: i32) -> (i32, i32, i32) {
    %c0_i32 = arith.constant 0 : i32
    %c0_i32_0 = arith.constant 0 : i32
    %c0_i32_1 = arith.constant 0 : i32
    return %arg0, %c0_i32, %c0_i32_0 : i32, i32, i32
  }
}

</mosaic_0001>

<llo_original>
// kernel: tpu_custom_call.1
$region0: #{tpu_custom_call.1}
  #allocation0 [shape = 'u32[]', space=smem, size = 0x4, offset = 0x4, fixed_abs, tag = 'smem constant byte address 0x4 - core index']
  #allocation1 [shape = 'u32[144,128]{1,0:T(1,128)}', space=vmem, size = 0x12000, scoped, tag = 'internal scratch']
  %s0 = inlined_call_operand.vmem [shape: f32[1,1344], index: 0, kind: input, shape index: {}]
  %s1 = inlined_call_operand.vmem [shape: f32[1,1344,196], index: 1, kind: input, shape index: {}]
  %s2 = inlined_call_operand.vmem [shape: f32[224,1344], index: 2, kind: input, shape index: {}]
  %s3 = inlined_call_operand.vmem [shape: f32[1,224,196], index: 3, kind: output, shape index: {}]
  %s4 = sld [smem:[#allocation0]]
  $region22: #{tpu_custom_call.1} parent=0
    _
  %s6 = ssub.s32 1, %s4
  %s7 = scalar_select 0, %s6, %s4
  // Predicated region
  $region2: #{tpu_custom_call.1} parent=0 // pred_check
    _
  $region3: #{tpu_custom_call.1} parent=0 // pred_check_branch
    %9 = sbr.rel (0) target = $region5
  $region4: #{tpu_custom_call.1} parent=0 // pred_region
    _
  $region5: #{tpu_custom_call.1} parent=0 // pred_fallthru
    _
  // Predicated region
  $region6: #{tpu_custom_call.1} parent=0 // pred_check
    _
  $region7: #{tpu_custom_call.1} parent=0 // pred_check_branch
    %11 = sbr.rel (0) target = $region9
  $region8: #{tpu_custom_call.1} parent=0 // pred_region
    _
  $region9: #{tpu_custom_call.1} parent=0 // pred_fallthru
    _
  // Predicated region
  $region10: #{tpu_custom_call.1} parent=0 // pred_check
    _
  $region11: #{tpu_custom_call.1} parent=0 // pred_check_branch
    %13 = sbr.rel (0) target = $region13
  $region12: #{tpu_custom_call.1} parent=0 // pred_region
    _
  $region13: #{tpu_custom_call.1} parent=0 // pred_fallthru
    _
  %v14 = vld [vmem:[%s0] sm:$0xff]
  %v15 = vld [vmem:[%s0 + $0x8] sm:$0x7]
  %v16 = vxor.u32 %v14, 2147483648
  %v17 = vxor.u32 %v15, 2147483648
  %v18 = vmul.f32 %v16, 1.442695
  %v19 = vpow.pop %v18
  %v20 = vmul.f32 %v17, 1.442695
  %v21 = vpow.pop %v20
  %v22 = vadd.f32 %v19, 1.0
  %v23 = vadd.f32 %v21, 1.0
  %v24 = vrcp.pop %v22
  %v25 = vmul.f32 1.0, %v24
  %v26 = vrcp.pop %v23
  %v27 = vmul.f32 1.0, %v26
  %v28 = vld [vmem:[%s2] sm:$0xff]
  %v29 = vld [vmem:[%s2 + $0x8] sm:$0xff]
  %v30 = vld [vmem:[%s2 + $0x10] sm:$0xff]
  %v31 = vld [vmem:[%s2 + $0x18] sm:$0xff]
  %v32 = vld [vmem:[%s2 + $0x20] sm:$0xff]
  %v33 = vld [vmem:[%s2 + $0x28] sm:$0xff]
  %v34 = vld [vmem:[%s2 + $0x30] sm:$0xff]
  %v35 = vld [vmem:[%s2 + $0x38] sm:$0xff]
  %v36 = vld [vmem:[%s2 + $0x40] sm:$0xff]
  %v37 = vld [vmem:[%s2 + $0x48] sm:$0xff]
  %v38 = vld [vmem:[%s2 + $0x50] sm:$0xff]
  %v39 = vld [vmem:[%s2 + $0x58] sm:$0xff]
  %v40 = vld [vmem:[%s2 + $0x60] sm:$0xff]
  %v41 = vld [vmem:[%s2 + $0x68] sm:$0xff]
  %v42 = vld [vmem:[%s2 + $0x70] sm:$0xff]
  %v43 = vld [vmem:[%s2 + $0x78] sm:$0xff]
  %v44 = vld [vmem:[%s2 + $0x80] sm:$0xff]
  %v45 = vld [vmem:[%s2 + $0x88] sm:$0xff]
  %v46 = vld [vmem:[%s2 + $0x90] sm:$0xff]
  %v47 = vld [vmem:[%s2 + $0x98] sm:$0xff]
  %v48 = vld [vmem:[%s2 + $0xa0] sm:$0xff]
  %v49 = vld [vmem:[%s2 + $0xa8] sm:$0xff]
  %v50 = vld [vmem:[%s2 + $0xb0] sm:$0xff]
  %v51 = vld [vmem:[%s2 + $0xb8] sm:$0xff]
  %v52 = vld [vmem:[%s2 + $0xc0] sm:$0xff]
  %v53 = vld [vmem:[%s2 + $0xc8] sm:$0xff]
  %v54 = vld [vmem:[%s2 + $0xd0] sm:$0xff]
  %v55 = vld [vmem:[%s2 + $0xd8] sm:$0xff]
  %v56 = vld [vmem:[%s2 + $0xe0] sm:$0xff]
  %v57 = vld [vmem:[%s2 + $0xe8] sm:$0xff]
  %v58 = vld [vmem:[%s2 + $0xf0] sm:$0xff]
  %v59 = vld [vmem:[%s2 + $0xf8] sm:$0xff]
  %v60 = vld [vmem:[%s2 + $0x100] sm:$0xff]
  %v61 = vld [vmem:[%s2 + $0x108] sm:$0xff]
  %v62 = vld [vmem:[%s2 + $0x110] sm:$0xff]
  %v63 = vld [vmem:[%s2 + $0x118] sm:$0xff]
  %v64 = vld [vmem:[%s2 + $0x120] sm:$0xff]
  %v65 = vld [vmem:[%s2 + $0x128] sm:$0xff]
  %v66 = vld [vmem:[%s2 + $0x130] sm:$0xff]
  %v67 = vld [vmem:[%s2 + $0x138] sm:$0xff]
  %v68 = vld [vmem:[%s2 + $0x140] sm:$0xff]
  %v69 = vld [vmem:[%s2 + $0x148] sm:$0xff]
  %v70 = vld [vmem:[%s2 + $0x150] sm:$0xff]
  %v71 = vld [vmem:[%s2 + $0x158] sm:$0xff]
  %v72 = vld [vmem:[%s2 + $0x160] sm:$0xff]
  %v73 = vld [vmem:[%s2 + $0x168] sm:$0xff]
  %v74 = vld [vmem:[%s2 + $0x170] sm:$0xff]
  %v75 = vld [vmem:[%s2 + $0x178] sm:$0xff]
  %v76 = vld [vmem:[%s2 + $0x180] sm:$0xff]
  %v77 = vld [vmem:[%s2 + $0x188] sm:$0xff]
  %v78 = vld [vmem:[%s2 + $0x190] sm:$0xff]
  %v79 = vld [vmem:[%s2 + $0x198] sm:$0xff]
  %v80 = vld [vmem:[%s2 + $0x1a0] sm:$0xff]
  %v81 = vld [vmem:[%s2 + $0x1a8] sm:$0xff]
  %v82 = vld [vmem:[%s2 + $0x1b0] sm:$0xff]
  %v83 = vld [vmem:[%s2 + $0x1b8] sm:$0xff]
  %v84 = vld [vmem:[%s2 + $0x1c0] sm:$0xff]
  %v85 = vld [vmem:[%s2 + $0x1c8] sm:$0xff]
  %v86 = vld [vmem:[%s2 + $0x1d0] sm:$0xff]
  %v87 = vld [vmem:[%s2 + $0x1d8] sm:$0xff]
  %v88 = vld [vmem:[%s2 + $0x1e0] sm:$0xff]
  %v89 = vld [vmem:[%s2 + $0x1e8] sm:$0xff]
  %v90 = vld [vmem:[%s2 + $0x1f0] sm:$0xff]
  %v91 = vld [vmem:[%s2 + $0x1f8] sm:$0xff]
  %v92 = vld [vmem:[%s2 + $0x200] sm:$0xff]
  %v93 = vld [vmem:[%s2 + $0x208] sm:$0xff]
  %v94 = vld [vmem:[%s2 + $0x210] sm:$0xff]
  %v95 = vld [vmem:[%s2 + $0x218] sm:$0xff]
  %v96 = vld [vmem:[%s2 + $0x220] sm:$0xff]
  %v97 = vld [vmem:[%s2 + $0x228] sm:$0xff]
  %v98 = vld [vmem:[%s2 + $0x230] sm:$0xff]
  %v99 = vld [vmem:[%s2 + $0x238] sm:$0xff]
  %v100 = vld [vmem:[%s2 + $0x240] sm:$0xff]
  %v101 = vld [vmem:[%s2 + $0x248] sm:$0xff]
  %v102 = vld [vmem:[%s2 + $0x250] sm:$0xff]
  %v103 = vld [vmem:[%s2 + $0x258] sm:$0xff]
  %v104 = vld [vmem:[%s2 + $0x260] sm:$0xff]
  %v105 = vld [vmem:[%s2 + $0x268] sm:$0xff]
  %v106 = vld [vmem:[%s2 + $0x270] sm:$0xff]
  %v107 = vld [vmem:[%s2 + $0x278] sm:$0xff]
  %v108 = vld [vmem:[%s2 + $0x280] sm:$0xff]
  %v109 = vld [vmem:[%s2 + $0x288] sm:$0xff]
  %v110 = vld [vmem:[%s2 + $0x290] sm:$0xff]
  %v111 = vld [vmem:[%s2 + $0x298] sm:$0xff]
  %v112 = vld [vmem:[%s2 + $0x2a0] sm:$0xff]
  %v113 = vld [vmem:[%s2 + $0x2a8] sm:$0xff]
  %v114 = vld [vmem:[%s2 + $0x2b0] sm:$0xff]
  %v115 = vld [vmem:[%s2 + $0x2b8] sm:$0xff]
  %v116 = vld [vmem:[%s2 + $0x2c0] sm:$0xff]
  %v117 = vld [vmem:[%s2 + $0x2c8] sm:$0xff]
  %v118 = vld [vmem:[%s2 + $0x2d0] sm:$0xff]
  %v119 = vld [vmem:[%s2 + $0x2d8] sm:$0xff]
  %v120 = vld [vmem:[%s2 + $0x2e0] sm:$0xff]
  %v121 = vld [vmem:[%s2 + $0x2e8] sm:$0xff]
  %v122 = vld [vmem:[%s2 + $0x2f0] sm:$0xff]
  %v123 = vld [vmem:[%s2 + $0x2f8] sm:$0xff]
  %v124 = vld [vmem:[%s2 + $0x300] sm:$0xff]
  %v125 = vld [vmem:[%s2 + $0x308] sm:$0xff]
  %v126 = vld [vmem:[%s2 + $0x310] sm:$0xff]
  %v127 = vld [vmem:[%s2 + $0x318] sm:$0xff]
  %v128 = vld [vmem:[%s2 + $0x320] sm:$0xff]
  %v129 = vld [vmem:[%s2 + $0x328] sm:$0xff]
  %v130 = vld [vmem:[%s2 + $0x330] sm:$0xff]
  %v131 = vld [vmem:[%s2 + $0x338] sm:$0xff]
  %v132 = vld [vmem:[%s2 + $0x340] sm:$0xff]
  %v133 = vld [vmem:[%s2 + $0x348] sm:$0xff]
  %v134 = vld [vmem:[%s2 + $0x350] sm:$0xff]
  %v135 = vld [vmem:[%s2 + $0x358] sm:$0xff]
  %v136 = vld [vmem:[%s2 + $0x360] sm:$0xff]
  %v137 = vld [vmem:[%s2 + $0x368] sm:$0xff]
  %v138 = vld [vmem:[%s2 + $0x370] sm:$0xff]
  %v139 = vld [vmem:[%s2 + $0x378] sm:$0xff]
  %v140 = vld [vmem:[%s2 + $0x380] sm:$0xff]
  %v141 = vld [vmem:[%s2 + $0x388] sm:$0xff]
  %v142 = vld [vmem:[%s2 + $0x390] sm:$0xff]
  %v143 = vld [vmem:[%s2 + $0x398] sm:$0xff]
  %v144 = vld [vmem:[%s2 + $0x3a0] sm:$0xff]
  %v145 = vld [vmem:[%s2 + $0x3a8] sm:$0xff]
  %v146 = vld [vmem:[%s2 + $0x3b0] sm:$0xff]
  %v147 = vld [vmem:[%s2 + $0x3b8] sm:$0xff]
  %v148 = vld [vmem:[%s2 + $0x3c0] sm:$0xff]
  %v149 = vld [vmem:[%s2 + $0x3c8] sm:$0xff]
  %v150 = vld [vmem:[%s2 + $0x3d0] sm:$0xff]
  %v151 = vld [vmem:[%s2 + $0x3d8] sm:$0xff]
  %v152 = vld [vmem:[%s2 + $0x3e0] sm:$0xff]
  %v153 = vld [vmem:[%s2 + $0x3e8] sm:$0xff]
  %v154 = vld [vmem:[%s2 + $0x3f0] sm:$0xff]
  %v155 = vld [vmem:[%s2 + $0x3f8] sm:$0xff]
  %v156 = vld [vmem:[%s2 + $0x400] sm:$0xff]
  %v157 = vld [vmem:[%s2 + $0x408] sm:$0xff]
  %v158 = vld [vmem:[%s2 + $0x410] sm:$0xff]
  %v159 = vld [vmem:[%s2 + $0x418] sm:$0xff]
  %v160 = vld [vmem:[%s2 + $0x420] sm:$0xff]
  %v161 = vld [vmem:[%s2 + $0x428] sm:$0xff]
  %v162 = vld [vmem:[%s2 + $0x430] sm:$0xff]
  %v163 = vld [vmem:[%s2 + $0x438] sm:$0xff]
  %v164 = vld [vmem:[%s2 + $0x440] sm:$0xff]
  %v165 = vld [vmem:[%s2 + $0x448] sm:$0xff]
  %v166 = vld [vmem:[%s2 + $0x450] sm:$0xff]
  %v167 = vld [vmem:[%s2 + $0x458] sm:$0xff]
  %v168 = vld [vmem:[%s2 + $0x460] sm:$0xff]
  %v169 = vld [vmem:[%s2 + $0x468] sm:$0xff]
  %v170 = vld [vmem:[%s2 + $0x470] sm:$0xff]
  %v171 = vld [vmem:[%s2 + $0x478] sm:$0xff]
  %v172 = vld [vmem:[%s2 + $0x480] sm:$0xff]
  %v173 = vld [vmem:[%s2 + $0x488] sm:$0xff]
  %v174 = vld [vmem:[%s2 + $0x490] sm:$0xff]
  %v175 = vld [vmem:[%s2 + $0x498] sm:$0xff]
  %v176 = vld [vmem:[%s2 + $0x4a0] sm:$0xff]
  %v177 = vld [vmem:[%s2 + $0x4a8] sm:$0xff]
  %v178 = vld [vmem:[%s2 + $0x4b0] sm:$0xff]
  %v179 = vld [vmem:[%s2 + $0x4b8] sm:$0xff]
  %v180 = vld [vmem:[%s2 + $0x4c0] sm:$0xff]
  %v181 = vld [vmem:[%s2 + $0x4c8] sm:$0xff]
  %v182 = vld [vmem:[%s2 + $0x4d0] sm:$0xff]
  %v183 = vld [vmem:[%s2 + $0x4d8] sm:$0xff]
  %v184 = vld [vmem:[%s2 + $0x4e0] sm:$0xff]
  %v185 = vld [vmem:[%s2 + $0x4e8] sm:$0xff]
  %v186 = vld [vmem:[%s2 + $0x4f0] sm:$0xff]
  %v187 = vld [vmem:[%s2 + $0x4f8] sm:$0xff]
  %v188 = vld [vmem:[%s2 + $0x500] sm:$0xff]
  %v189 = vld [vmem:[%s2 + $0x508] sm:$0xff]
  %v190 = vld [vmem:[%s2 + $0x510] sm:$0xff]
  %v191 = vld [vmem:[%s2 + $0x518] sm:$0xff]
  %v192 = vld [vmem:[%s2 + $0x520] sm:$0xff]
  %v193 = vld [vmem:[%s2 + $0x528] sm:$0xff]
  %v194 = vld [vmem:[%s2 + $0x530] sm:$0xff]
  %v195 = vld [vmem:[%s2 + $0x538] sm:$0xff]
  %v196 = vld [vmem:[%s2 + $0x540] sm:$0xff]
  %v197 = vld [vmem:[%s2 + $0x548] sm:$0xff]
  %v198 = vld [vmem:[%s2 + $0x550] sm:$0xff]
  %v199 = vld [vmem:[%s2 + $0x558] sm:$0xff]
  %v200 = vld [vmem:[%s2 + $0x560] sm:$0xff]
  %v201 = vld [vmem:[%s2 + $0x568] sm:$0xff]
  %v202 = vld [vmem:[%s2 + $0x570] sm:$0xff]
  %v203 = vld [vmem:[%s2 + $0x578] sm:$0xff]
  %v204 = vld [vmem:[%s2 + $0x580] sm:$0xff]
  %v205 = vld [vmem:[%s2 + $0x588] sm:$0xff]
  %v206 = vld [vmem:[%s2 + $0x590] sm:$0xff]
  %v207 = vld [vmem:[%s2 + $0x598] sm:$0xff]
  %v208 = vld [vmem:[%s2 + $0x5a0] sm:$0xff]
  %v209 = vld [vmem:[%s2 + $0x5a8] sm:$0xff]
  %v210 = vld [vmem:[%s2 + $0x5b0] sm:$0xff]
  %v211 = vld [vmem:[%s2 + $0x5b8] sm:$0xff]
  %v212 = vld [vmem:[%s2 + $0x5c0] sm:$0xff]
  %v213 = vld [vmem:[%s2 + $0x5c8] sm:$0xff]
  %v214 = vld [vmem:[%s2 + $0x5d0] sm:$0xff]
  %v215 = vld [vmem:[%s2 + $0x5d8] sm:$0xff]
  %v216 = vld [vmem:[%s2 + $0x5e0] sm:$0xff]
  %v217 = vld [vmem:[%s2 + $0x5e8] sm:$0xff]
  %v218 = vld [vmem:[%s2 + $0x5f0] sm:$0xff]
  %v219 = vld [vmem:[%s2 + $0x5f8] sm:$0xff]
  %v220 = vld [vmem:[%s2 + $0x600] sm:$0xff]
  %v221 = vld [vmem:[%s2 + $0x608] sm:$0xff]
  %v222 = vld [vmem:[%s2 + $0x610] sm:$0xff]
  %v223 = vld [vmem:[%s2 + $0x618] sm:$0xff]
  %v224 = vld [vmem:[%s2 + $0x620] sm:$0xff]
  %v225 = vld [vmem:[%s2 + $0x628] sm:$0xff]
  %v226 = vld [vmem:[%s2 + $0x630] sm:$0xff]
  %v227 = vld [vmem:[%s2 + $0x638] sm:$0xff]
  %v228 = vld [vmem:[%s2 + $0x640] sm:$0xff]
  %v229 = vld [vmem:[%s2 + $0x648] sm:$0xff]
  %v230 = vld [vmem:[%s2 + $0x650] sm:$0xff]
  %v231 = vld [vmem:[%s2 + $0x658] sm:$0xff]
  %v232 = vld [vmem:[%s2 + $0x660] sm:$0xff]
  %v233 = vld [vmem:[%s2 + $0x668] sm:$0xff]
  %v234 = vld [vmem:[%s2 + $0x670] sm:$0xff]
  %v235 = vld [vmem:[%s2 + $0x678] sm:$0xff]
  %v236 = vld [vmem:[%s2 + $0x680] sm:$0xff]
  %v237 = vld [vmem:[%s2 + $0x688] sm:$0xff]
  %v238 = vld [vmem:[%s2 + $0x690] sm:$0xff]
  %v239 = vld [vmem:[%s2 + $0x698] sm:$0xff]
  %v240 = vld [vmem:[%s2 + $0x6a0] sm:$0xff]
  %v241 = vld [vmem:[%s2 + $0x6a8] sm:$0xff]
  %v242 = vld [vmem:[%s2 + $0x6b0] sm:$0xff]
  %v243 = vld [vmem:[%s2 + $0x6b8] sm:$0xff]
  %v244 = vld [vmem:[%s2 + $0x6c0] sm:$0xff]
  %v245 = vld [vmem:[%s2 + $0x6c8] sm:$0xff]
  %v246 = vld [vmem:[%s2 + $0x6d0] sm:$0xff]
  %v247 = vld [vmem:[%s2 + $0x6d8] sm:$0xff]
  %v248 = vld [vmem:[%s2 + $0x6e0] sm:$0xff]
  %v249 = vld [vmem:[%s2 + $0x6e8] sm:$0xff]
  %v250 = vld [vmem:[%s2 + $0x6f0] sm:$0xff]
  %v251 = vld [vmem:[%s2 + $0x6f8] sm:$0xff]
  %v252 = vld [vmem:[%s2 + $0x700] sm:$0xff]
  %v253 = vld [vmem:[%s2 + $0x708] sm:$0xff]
  %v254 = vld [vmem:[%s2 + $0x710] sm:$0xff]
  %v255 = vld [vmem:[%s2 + $0x718] sm:$0xff]
  %v256 = vld [vmem:[%s2 + $0x720] sm:$0xff]
  %v257 = vld [vmem:[%s2 + $0x728] sm:$0xff]
  %v258 = vld [vmem:[%s2 + $0x730] sm:$0xff]
  %v259 = vld [vmem:[%s2 + $0x738] sm:$0xff]
  %v260 = vld [vmem:[%s2 + $0x740] sm:$0xff]
  %v261 = vld [vmem:[%s2 + $0x748] sm:$0xff]
  %v262 = vld [vmem:[%s2 + $0x750] sm:$0xff]
  %v263 = vld [vmem:[%s2 + $0x758] sm:$0xff]
  %v264 = vld [vmem:[%s2 + $0x760] sm:$0xff]
  %v265 = vld [vmem:[%s2 + $0x768] sm:$0xff]
  %v266 = vld [vmem:[%s2 + $0x770] sm:$0xff]
  %v267 = vld [vmem:[%s2 + $0x778] sm:$0xff]
  %v268 = vld [vmem:[%s2 + $0x780] sm:$0xff]
  %v269 = vld [vmem:[%s2 + $0x788] sm:$0xff]
  %v270 = vld [vmem:[%s2 + $0x790] sm:$0xff]
  %v271 = vld [vmem:[%s2 + $0x798] sm:$0xff]
  %v272 = vld [vmem:[%s2 + $0x7a0] sm:$0xff]
  %v273 = vld [vmem:[%s2 + $0x7a8] sm:$0xff]
  %v274 = vld [vmem:[%s2 + $0x7b0] sm:$0xff]
  %v275 = vld [vmem:[%s2 + $0x7b8] sm:$0xff]
  %v276 = vld [vmem:[%s2 + $0x7c0] sm:$0xff]
  %v277 = vld [vmem:[%s2 + $0x7c8] sm:$0xff]
  %v278 = vld [vmem:[%s2 + $0x7d0] sm:$0xff]
  %v279 = vld [vmem:[%s2 + $0x7d8] sm:$0xff]
  %v280 = vld [vmem:[%s2 + $0x7e0] sm:$0xff]
  %v281 = vld [vmem:[%s2 + $0x7e8] sm:$0xff]
  %v282 = vld [vmem:[%s2 + $0x7f0] sm:$0xff]
  %v283 = vld [vmem:[%s2 + $0x7f8] sm:$0xff]
  %v284 = vld [vmem:[%s2 + $0x800] sm:$0xff]
  %v285 = vld [vmem:[%s2 + $0x808] sm:$0xff]
  %v286 = vld [vmem:[%s2 + $0x810] sm:$0xff]
  %v287 = vld [vmem:[%s2 + $0x818] sm:$0xff]
  %v288 = vld [vmem:[%s2 + $0x820] sm:$0xff]
  %v289 = vld [vmem:[%s2 + $0x828] sm:$0xff]
  %v290 = vld [vmem:[%s2 + $0x830] sm:$0xff]
  %v291 = vld [vmem:[%s2 + $0x838] sm:$0xff]
  %v292 = vld [vmem:[%s2 + $0x840] sm:$0xff]
  %v293 = vld [vmem:[%s2 + $0x848] sm:$0xff]
  %v294 = vld [vmem:[%s2 + $0x850] sm:$0xff]
  %v295 = vld [vmem:[%s2 + $0x858] sm:$0xff]
  %v296 = vld [vmem:[%s2 + $0x860] sm:$0xff]
  %v297 = vld [vmem:[%s2 + $0x868] sm:$0xff]
  %v298 = vld [vmem:[%s2 + $0x870] sm:$0xff]
  %v299 = vld [vmem:[%s2 + $0x878] sm:$0xff]
  %v300 = vld [vmem:[%s2 + $0x880] sm:$0xff]
  %v301 = vld [vmem:[%s2 + $0x888] sm:$0xff]
  %v302 = vld [vmem:[%s2 + $0x890] sm:$0xff]
  %v303 = vld [vmem:[%s2 + $0x898] sm:$0xff]
  %v304 = vld [vmem:[%s2 + $0x8a0] sm:$0xff]
  %v305 = vld [vmem:[%s2 + $0x8a8] sm:$0xff]
  %v306 = vld [vmem:[%s2 + $0x8b0] sm:$0xff]
  %v307 = vld [vmem:[%s2 + $0x8b8] sm:$0xff]
  %v308 = vld [vmem:[%s2 + $0x8c0] sm:$0xff]
  %v309 = vld [vmem:[%s2 + $0x8c8] sm:$0xff]
  %v310 = vld [vmem:[%s2 + $0x8d0] sm:$0xff]
  %v311 = vld [vmem:[%s2 + $0x8d8] sm:$0xff]
  %v312 = vld [vmem:[%s2 + $0x8e0] sm:$0xff]
  %v313 = vld [vmem:[%s2 + $0x8e8] sm:$0xff]
  %v314 = vld [vmem:[%s2 + $0x8f0] sm:$0xff]
  %v315 = vld [vmem:[%s2 + $0x8f8] sm:$0xff]
  %v316 = vld [vmem:[%s2 + $0x900] sm:$0xff]
  %v317 = vld [vmem:[%s2 + $0x908] sm:$0xff]
  %v318 = vld [vmem:[%s2 + $0x910] sm:$0xff]
  %v319 = vld [vmem:[%s2 + $0x918] sm:$0xff]
  %v320 = vld [vmem:[%s2 + $0x920] sm:$0xff]
  %v321 = vld [vmem:[%s2 + $0x928] sm:$0xff]
  %v322 = vld [vmem:[%s2 + $0x930] sm:$0xff]
  %v323 = vld [vmem:[%s2 + $0x938] sm:$0xff]
  %v324 = vld [vmem:[%s2 + $0x940] sm:$0xff]
  %v325 = vld [vmem:[%s2 + $0x948] sm:$0xff]
  %v326 = vld [vmem:[%s2 + $0x950] sm:$0xff]
  %v327 = vld [vmem:[%s2 + $0x958] sm:$0xff]
  %v328 = vld [vmem:[%s2 + $0x960] sm:$0xff]
  %v329 = vld [vmem:[%s2 + $0x968] sm:$0xff]
  %v330 = vld [vmem:[%s2 + $0x970] sm:$0xff]
  %v331 = vld [vmem:[%s2 + $0x978] sm:$0xff]
  %v332 = vld [vmem:[%s2 + $0x980] sm:$0xff]
  %v333 = vld [vmem:[%s2 + $0x988] sm:$0xff]
  %v334 = vld [vmem:[%s2 + $0x990] sm:$0xff]
  %v335 = vld [vmem:[%s2 + $0x998] sm:$0xff]
  %v338 = vlaneseq
  %v339 = vshrl.u32 %v338, 7
  %v340 = vsub.s32 0, %v339
  %v341 = vrot.slane %v25, %v340
  %v342 = vlaneseq
  %v343 = vshrl.u32 %v342, 7
  %v344 = vsub.s32 1, %v343
  %v345 = vrot.slane %v25, %v344
  %v346 = vlaneseq
  %v347 = vshrl.u32 %v346, 7
  %v348 = vsub.s32 2, %v347
  %v349 = vrot.slane %v25, %v348
  %v350 = vlaneseq
  %v351 = vshrl.u32 %v350, 7
  %v352 = vsub.s32 3, %v351
  %v353 = vrot.slane %v25, %v352
  %v354 = vlaneseq
  %v355 = vshrl.u32 %v354, 7
  %v356 = vsub.s32 4, %v355
  %v357 = vrot.slane %v25, %v356
  %v358 = vlaneseq
  %v359 = vshrl.u32 %v358, 7
  %v360 = vsub.s32 5, %v359
  %v361 = vrot.slane %v25, %v360
  %v362 = vlaneseq
  %v363 = vshrl.u32 %v362, 7
  %v364 = vsub.s32 6, %v363
  %v365 = vrot.slane %v25, %v364
  %v366 = vlaneseq
  %v367 = vshrl.u32 %v366, 7
  %v368 = vsub.s32 7, %v367
  %v369 = vrot.slane %v25, %v368
  %v370 = vlaneseq
  %v371 = vshrl.u32 %v370, 7
  %v372 = vsub.s32 0, %v371
  %v373 = vrot.slane %v27, %v372
  %v374 = vlaneseq
  %v375 = vshrl.u32 %v374, 7
  %v376 = vsub.s32 1, %v375
  %v377 = vrot.slane %v27, %v376
  %v378 = vlaneseq
  %v379 = vshrl.u32 %v378, 7
  %v380 = vsub.s32 2, %v379
  %v381 = vrot.slane %v27, %v380
  %v393 = vmul.f32 %v28, %v341
  %v394 = vmul.f32 %v29, %v345
  %v395 = vmul.f32 %v30, %v349
  %v396 = vmul.f32 %v31, %v353
  %v397 = vmul.f32 %v32, %v357
  %v398 = vmul.f32 %v33, %v361
  %v399 = vmul.f32 %v34, %v365
  %v400 = vmul.f32 %v35, %v369
  %v401 = vmul.f32 %v36, %v373
  %v402 = vmul.f32 %v37, %v377
  %v403 = vmul.f32 %v38, %v381
  %v404 = vmul.f32 %v39, %v341
  %v405 = vmul.f32 %v40, %v345
  %v406 = vmul.f32 %v41, %v349
  %v407 = vmul.f32 %v42, %v353
  %v408 = vmul.f32 %v43, %v357
  %v409 = vmul.f32 %v44, %v361
  %v410 = vmul.f32 %v45, %v365
  %v411 = vmul.f32 %v46, %v369
  %v412 = vmul.f32 %v47, %v373
  %v413 = vmul.f32 %v48, %v377
  %v414 = vmul.f32 %v49, %v381
  %v415 = vmul.f32 %v50, %v341
  %v416 = vmul.f32 %v51, %v345
  %v417 = vmul.f32 %v52, %v349
  %v418 = vmul.f32 %v53, %v353
  %v419 = vmul.f32 %v54, %v357
  %v420 = vmul.f32 %v55, %v361
  %v421 = vmul.f32 %v56, %v365
  %v422 = vmul.f32 %v57, %v369
  %v423 = vmul.f32 %v58, %v373
  %v424 = vmul.f32 %v59, %v377
  %v425 = vmul.f32 %v60, %v381
  %v426 = vmul.f32 %v61, %v341
  %v427 = vmul.f32 %v62, %v345
  %v428 = vmul.f32 %v63, %v349
  %v429 = vmul.f32 %v64, %v353
  %v430 = vmul.f32 %v65, %v357
  %v431 = vmul.f32 %v66, %v361
  %v432 = vmul.f32 %v67, %v365
  %v433 = vmul.f32 %v68, %v369
  %v434 = vmul.f32 %v69, %v373
  %v435 = vmul.f32 %v70, %v377
  %v436 = vmul.f32 %v71, %v381
  %v437 = vmul.f32 %v72, %v341
  %v438 = vmul.f32 %v73, %v345
  %v439 = vmul.f32 %v74, %v349
  %v440 = vmul.f32 %v75, %v353
  %v441 = vmul.f32 %v76, %v357
  %v442 = vmul.f32 %v77, %v361
  %v443 = vmul.f32 %v78, %v365
  %v444 = vmul.f32 %v79, %v369
  %v445 = vmul.f32 %v80, %v373
  %v446 = vmul.f32 %v81, %v377
  %v447 = vmul.f32 %v82, %v381
  %v448 = vmul.f32 %v83, %v341
  %v449 = vmul.f32 %v84, %v345
  %v450 = vmul.f32 %v85, %v349
  %v451 = vmul.f32 %v86, %v353
  %v452 = vmul.f32 %v87, %v357
  %v453 = vmul.f32 %v88, %v361
  %v454 = vmul.f32 %v89, %v365
  %v455 = vmul.f32 %v90, %v369
  %v456 = vmul.f32 %v91, %v373
  %v457 = vmul.f32 %v92, %v377
  %v458 = vmul.f32 %v93, %v381
  %v459 = vmul.f32 %v94, %v341
  %v460 = vmul.f32 %v95, %v345
  %v461 = vmul.f32 %v96, %v349
  %v462 = vmul.f32 %v97, %v353
  %v463 = vmul.f32 %v98, %v357
  %v464 = vmul.f32 %v99, %v361
  %v465 = vmul.f32 %v100, %v365
  %v466 = vmul.f32 %v101, %v369
  %v467 = vmul.f32 %v102, %v373
  %v468 = vmul.f32 %v103, %v377
  %v469 = vmul.f32 %v104, %v381
  %v470 = vmul.f32 %v105, %v341
  %v471 = vmul.f32 %v106, %v345
  %v472 = vmul.f32 %v107, %v349
  %v473 = vmul.f32 %v108, %v353
  %v474 = vmul.f32 %v109, %v357
  %v475 = vmul.f32 %v110, %v361
  %v476 = vmul.f32 %v111, %v365
  %v477 = vmul.f32 %v112, %v369
  %v478 = vmul.f32 %v113, %v373
  %v479 = vmul.f32 %v114, %v377
  %v480 = vmul.f32 %v115, %v381
  %v481 = vmul.f32 %v116, %v341
  %v482 = vmul.f32 %v117, %v345
  %v483 = vmul.f32 %v118, %v349
  %v484 = vmul.f32 %v119, %v353
  %v485 = vmul.f32 %v120, %v357
  %v486 = vmul.f32 %v121, %v361
  %v487 = vmul.f32 %v122, %v365
  %v488 = vmul.f32 %v123, %v369
  %v489 = vmul.f32 %v124, %v373
  %v490 = vmul.f32 %v125, %v377
  %v491 = vmul.f32 %v126, %v381
  %v492 = vmul.f32 %v127, %v341
  %v493 = vmul.f32 %v128, %v345
  %v494 = vmul.f32 %v129, %v349
  %v495 = vmul.f32 %v130, %v353
  %v496 = vmul.f32 %v131, %v357
  %v497 = vmul.f32 %v132, %v361
  %v498 = vmul.f32 %v133, %v365
  %v499 = vmul.f32 %v134, %v369
  %v500 = vmul.f32 %v135, %v373
  %v501 = vmul.f32 %v136, %v377
  %v502 = vmul.f32 %v137, %v381
  %v503 = vmul.f32 %v138, %v341
  %v504 = vmul.f32 %v139, %v345
  %v505 = vmul.f32 %v140, %v349
  %v506 = vmul.f32 %v141, %v353
  %v507 = vmul.f32 %v142, %v357
  %v508 = vmul.f32 %v143, %v361
  %v509 = vmul.f32 %v144, %v365
  %v510 = vmul.f32 %v145, %v369
  %v511 = vmul.f32 %v146, %v373
  %v512 = vmul.f32 %v147, %v377
  %v513 = vmul.f32 %v148, %v381
  %v514 = vmul.f32 %v149, %v341
  %v515 = vmul.f32 %v150, %v345
  %v516 = vmul.f32 %v151, %v349
  %v517 = vmul.f32 %v152, %v353
  %v518 = vmul.f32 %v153, %v357
  %v519 = vmul.f32 %v154, %v361
  %v520 = vmul.f32 %v155, %v365
  %v521 = vmul.f32 %v156, %v369
  %v522 = vmul.f32 %v157, %v373
  %v523 = vmul.f32 %v158, %v377
  %v524 = vmul.f32 %v159, %v381
  %v525 = vmul.f32 %v160, %v341
  %v526 = vmul.f32 %v161, %v345
  %v527 = vmul.f32 %v162, %v349
  %v528 = vmul.f32 %v163, %v353
  %v529 = vmul.f32 %v164, %v357
  %v530 = vmul.f32 %v165, %v361
  %v531 = vmul.f32 %v166, %v365
  %v532 = vmul.f32 %v167, %v369
  %v533 = vmul.f32 %v168, %v373
  %v534 = vmul.f32 %v169, %v377
  %v535 = vmul.f32 %v170, %v381
  %v536 = vmul.f32 %v171, %v341
  %v537 = vmul.f32 %v172, %v345
  %v538 = vmul.f32 %v173, %v349
  %v539 = vmul.f32 %v174, %v353
  %v540 = vmul.f32 %v175, %v357
  %v541 = vmul.f32 %v176, %v361
  %v542 = vmul.f32 %v177, %v365
  %v543 = vmul.f32 %v178, %v369
  %v544 = vmul.f32 %v179, %v373
  %v545 = vmul.f32 %v180, %v377
  %v546 = vmul.f32 %v181, %v381
  %v547 = vmul.f32 %v182, %v341
  %v548 = vmul.f32 %v183, %v345
  %v549 = vmul.f32 %v184, %v349
  %v550 = vmul.f32 %v185, %v353
  %v551 = vmul.f32 %v186, %v357
  %v552 = vmul.f32 %v187, %v361
  %v553 = vmul.f32 %v188, %v365
  %v554 = vmul.f32 %v189, %v369
  %v555 = vmul.f32 %v190, %v373
  %v556 = vmul.f32 %v191, %v377
  %v557 = vmul.f32 %v192, %v381
  %v558 = vmul.f32 %v193, %v341
  %v559 = vmul.f32 %v194, %v345
  %v560 = vmul.f32 %v195, %v349
  %v561 = vmul.f32 %v196, %v353
  %v562 = vmul.f32 %v197, %v357
  %v563 = vmul.f32 %v198, %v361
  %v564 = vmul.f32 %v199, %v365
  %v565 = vmul.f32 %v200, %v369
  %v566 = vmul.f32 %v201, %v373
  %v567 = vmul.f32 %v202, %v377
  %v568 = vmul.f32 %v203, %v381
  %v569 = vmul.f32 %v204, %v341
  %v570 = vmul.f32 %v205, %v345
  %v571 = vmul.f32 %v206, %v349
  %v572 = vmul.f32 %v207, %v353
  %v573 = vmul.f32 %v208, %v357
  %v574 = vmul.f32 %v209, %v361
  %v575 = vmul.f32 %v210, %v365
  %v576 = vmul.f32 %v211, %v369
  %v577 = vmul.f32 %v212, %v373
  %v578 = vmul.f32 %v213, %v377
  %v579 = vmul.f32 %v214, %v381
  %v580 = vmul.f32 %v215, %v341
  %v581 = vmul.f32 %v216, %v345
  %v582 = vmul.f32 %v217, %v349
  %v583 = vmul.f32 %v218, %v353
  %v584 = vmul.f32 %v219, %v357
  %v585 = vmul.f32 %v220, %v361
  %v586 = vmul.f32 %v221, %v365
  %v587 = vmul.f32 %v222, %v369
  %v588 = vmul.f32 %v223, %v373
  %v589 = vmul.f32 %v224, %v377
  %v590 = vmul.f32 %v225, %v381
  %v591 = vmul.f32 %v226, %v341
  %v592 = vmul.f32 %v227, %v345
  %v593 = vmul.f32 %v228, %v349
  %v594 = vmul.f32 %v229, %v353
  %v595 = vmul.f32 %v230, %v357
  %v596 = vmul.f32 %v231, %v361
  %v597 = vmul.f32 %v232, %v365
  %v598 = vmul.f32 %v233, %v369
  %v599 = vmul.f32 %v234, %v373
  %v600 = vmul.f32 %v235, %v377
  %v601 = vmul.f32 %v236, %v381
  %v602 = vmul.f32 %v237, %v341
  %v603 = vmul.f32 %v238, %v345
  %v604 = vmul.f32 %v239, %v349
  %v605 = vmul.f32 %v240, %v353
  %v606 = vmul.f32 %v241, %v357
  %v607 = vmul.f32 %v242, %v361
  %v608 = vmul.f32 %v243, %v365
  %v609 = vmul.f32 %v244, %v369
  %v610 = vmul.f32 %v245, %v373
  %v611 = vmul.f32 %v246, %v377
  %v612 = vmul.f32 %v247, %v381
  %v613 = vmul.f32 %v248, %v341
  %v614 = vmul.f32 %v249, %v345
  %v615 = vmul.f32 %v250, %v349
  %v616 = vmul.f32 %v251, %v353
  %v617 = vmul.f32 %v252, %v357
  %v618 = vmul.f32 %v253, %v361
  %v619 = vmul.f32 %v254, %v365
  %v620 = vmul.f32 %v255, %v369
  %v621 = vmul.f32 %v256, %v373
  %v622 = vmul.f32 %v257, %v377
  %v623 = vmul.f32 %v258, %v381
  %v624 = vmul.f32 %v259, %v341
  %v625 = vmul.f32 %v260, %v345
  %v626 = vmul.f32 %v261, %v349
  %v627 = vmul.f32 %v262, %v353
  %v628 = vmul.f32 %v263, %v357
  %v629 = vmul.f32 %v264, %v361
  %v630 = vmul.f32 %v265, %v365
  %v631 = vmul.f32 %v266, %v369
  %v632 = vmul.f32 %v267, %v373
  %v633 = vmul.f32 %v268, %v377
  %v634 = vmul.f32 %v269, %v381
  %v635 = vmul.f32 %v270, %v341
  %v636 = vmul.f32 %v271, %v345
  %v637 = vmul.f32 %v272, %v349
  %v638 = vmul.f32 %v273, %v353
  %v639 = vmul.f32 %v274, %v357
  %v640 = vmul.f32 %v275, %v361
  %v641 = vmul.f32 %v276, %v365
  %v642 = vmul.f32 %v277, %v369
  %v643 = vmul.f32 %v278, %v373
  %v644 = vmul.f32 %v279, %v377
  %v645 = vmul.f32 %v280, %v381
  %v646 = vmul.f32 %v281, %v341
  %v647 = vmul.f32 %v282, %v345
  %v648 = vmul.f32 %v283, %v349
  %v649 = vmul.f32 %v284, %v353
  %v650 = vmul.f32 %v285, %v357
  %v651 = vmul.f32 %v286, %v361
  %v652 = vmul.f32 %v287, %v365
  %v653 = vmul.f32 %v288, %v369
  %v654 = vmul.f32 %v289, %v373
  %v655 = vmul.f32 %v290, %v377
  %v656 = vmul.f32 %v291, %v381
  %v657 = vmul.f32 %v292, %v341
  %v658 = vmul.f32 %v293, %v345
  %v659 = vmul.f32 %v294, %v349
  %v660 = vmul.f32 %v295, %v353
  %v661 = vmul.f32 %v296, %v357
  %v662 = vmul.f32 %v297, %v361
  %v663 = vmul.f32 %v298, %v365
  %v664 = vmul.f32 %v299, %v369
  %v665 = vmul.f32 %v300, %v373
  %v666 = vmul.f32 %v301, %v377
  %v667 = vmul.f32 %v302, %v381
  %v668 = vmul.f32 %v303, %v341
  %v669 = vmul.f32 %v304, %v345
  %v670 = vmul.f32 %v305, %v349
  %v671 = vmul.f32 %v306, %v353
  %v672 = vmul.f32 %v307, %v357
  %v673 = vmul.f32 %v308, %v361
  %v674 = vmul.f32 %v309, %v365
  %v675 = vmul.f32 %v310, %v369
  %v676 = vmul.f32 %v311, %v373
  %v677 = vmul.f32 %v312, %v377
  %v678 = vmul.f32 %v313, %v381
  %v679 = vmul.f32 %v314, %v341
  %v680 = vmul.f32 %v315, %v345
  %v681 = vmul.f32 %v316, %v349
  %v682 = vmul.f32 %v317, %v353
  %v683 = vmul.f32 %v318, %v357
  %v684 = vmul.f32 %v319, %v361
  %v685 = vmul.f32 %v320, %v365
  %v686 = vmul.f32 %v321, %v369
  %v687 = vmul.f32 %v322, %v373
  %v688 = vmul.f32 %v323, %v377
  %v689 = vmul.f32 %v324, %v381
  %v690 = vmul.f32 %v325, %v341
  %v691 = vmul.f32 %v326, %v345
  %v692 = vmul.f32 %v327, %v349
  %v693 = vmul.f32 %v328, %v353
  %v694 = vmul.f32 %v329, %v357
  %v695 = vmul.f32 %v330, %v361
  %v696 = vmul.f32 %v331, %v365
  %v697 = vmul.f32 %v332, %v369
  %v698 = vmul.f32 %v333, %v373
  %v699 = vmul.f32 %v334, %v377
  %v700 = vmul.f32 %v335, %v381
  %v701 = vld [vmem:[%s1] sm:$0xff]
  %v702 = vld [vmem:[%s1 + $0x8] sm:$0xff]
  %v703 = vld [vmem:[%s1 + $0x10] sm:$0xff]
  %v704 = vld [vmem:[%s1 + $0x18] sm:$0xff]
  %v705 = vld [vmem:[%s1 + $0x20] sm:$0xff]
  %v706 = vld [vmem:[%s1 + $0x28] sm:$0xff]
  %v707 = vld [vmem:[%s1 + $0x30] sm:$0xff]
  %v708 = vld [vmem:[%s1 + $0x38] sm:$0xff]
  %v709 = vld [vmem:[%s1 + $0x40] sm:$0xff]
  %v710 = vld [vmem:[%s1 + $0x48] sm:$0xff]
  %v711 = vld [vmem:[%s1 + $0x50] sm:$0xff]
  %v712 = vld [vmem:[%s1 + $0x58] sm:$0xff]
  %v713 = vld [vmem:[%s1 + $0x60] sm:$0xff]
  %v714 = vld [vmem:[%s1 + $0x68] sm:$0xff]
  %v715 = vld [vmem:[%s1 + $0x70] sm:$0xff]
  %v716 = vld [vmem:[%s1 + $0x78] sm:$0xff]
  %v717 = vld [vmem:[%s1 + $0x80] sm:$0xff]
  %v718 = vld [vmem:[%s1 + $0x88] sm:$0xff]
  %v719 = vld [vmem:[%s1 + $0x90] sm:$0xff]
  %v720 = vld [vmem:[%s1 + $0x98] sm:$0xff]
  %v721 = vld [vmem:[%s1 + $0xa0] sm:$0xff]
  %v722 = vld [vmem:[%s1 + $0xa8] sm:$0xff]
  %v723 = vld [vmem:[%s1 + $0xb0] sm:$0xff]
  %v724 = vld [vmem:[%s1 + $0xb8] sm:$0xff]
  %v725 = vld [vmem:[%s1 + $0xc0] sm:$0xff]
  %v726 = vld [vmem:[%s1 + $0xc8] sm:$0xff]
  %v727 = vld [vmem:[%s1 + $0xd0] sm:$0xff]
  %v728 = vld [vmem:[%s1 + $0xd8] sm:$0xff]
  %v729 = vld [vmem:[%s1 + $0xe0] sm:$0xff]
  %v730 = vld [vmem:[%s1 + $0xe8] sm:$0xff]
  %v731 = vld [vmem:[%s1 + $0xf0] sm:$0xff]
  %v732 = vld [vmem:[%s1 + $0xf8] sm:$0xff]
  %v733 = vld [vmem:[%s1 + $0x100] sm:$0xff]
  %v734 = vld [vmem:[%s1 + $0x108] sm:$0xff]
  %v735 = vld [vmem:[%s1 + $0x110] sm:$0xff]
  %v736 = vld [vmem:[%s1 + $0x118] sm:$0xff]
  %v737 = vld [vmem:[%s1 + $0x120] sm:$0xff]
  %v738 = vld [vmem:[%s1 + $0x128] sm:$0xff]
  %v739 = vld [vmem:[%s1 + $0x130] sm:$0xff]
  %v740 = vld [vmem:[%s1 + $0x138] sm:$0xff]
  %v741 = vld [vmem:[%s1 + $0x140] sm:$0xff]
  %v742 = vld [vmem:[%s1 + $0x148] sm:$0xff]
  %v743 = vld [vmem:[%s1 + $0x150] sm:$0xff]
  %v744 = vld [vmem:[%s1 + $0x158] sm:$0xff]
  %v745 = vld [vmem:[%s1 + $0x160] sm:$0xff]
  %v746 = vld [vmem:[%s1 + $0x168] sm:$0xff]
  %v747 = vld [vmem:[%s1 + $0x170] sm:$0xff]
  %v748 = vld [vmem:[%s1 + $0x178] sm:$0xff]
  %v749 = vld [vmem:[%s1 + $0x180] sm:$0xff]
  %v750 = vld [vmem:[%s1 + $0x188] sm:$0xff]
  %v751 = vld [vmem:[%s1 + $0x190] sm:$0xff]
  %v752 = vld [vmem:[%s1 + $0x198] sm:$0xff]
  %v753 = vld [vmem:[%s1 + $0x1a0] sm:$0xff]
  %v754 = vld [vmem:[%s1 + $0x1a8] sm:$0xff]
  %v755 = vld [vmem:[%s1 + $0x1b0] sm:$0xff]
  %v756 = vld [vmem:[%s1 + $0x1b8] sm:$0xff]
  %v757 = vld [vmem:[%s1 + $0x1c0] sm:$0xff]
  %v758 = vld [vmem:[%s1 + $0x1c8] sm:$0xff]
  %v759 = vld [vmem:[%s1 + $0x1d0] sm:$0xff]
  %v760 = vld [vmem:[%s1 + $0x1d8] sm:$0xff]
  %v761 = vld [vmem:[%s1 + $0x1e0] sm:$0xff]
  %v762 = vld [vmem:[%s1 + $0x1e8] sm:$0xff]
  %v763 = vld [vmem:[%s1 + $0x1f0] sm:$0xff]
  %v764 = vld [vmem:[%s1 + $0x1f8] sm:$0xff]
  %v765 = vld [vmem:[%s1 + $0x200] sm:$0xff]
  %v766 = vld [vmem:[%s1 + $0x208] sm:$0xff]
  %v767 = vld [vmem:[%s1 + $0x210] sm:$0xff]
  %v768 = vld [vmem:[%s1 + $0x218] sm:$0xff]
  %v769 = vld [vmem:[%s1 + $0x220] sm:$0xff]
  %v770 = vld [vmem:[%s1 + $0x228] sm:$0xff]
  %v771 = vld [vmem:[%s1 + $0x230] sm:$0xff]
  %v772 = vld [vmem:[%s1 + $0x238] sm:$0xff]
  %v773 = vld [vmem:[%s1 + $0x240] sm:$0xff]
  %v774 = vld [vmem:[%s1 + $0x248] sm:$0xff]
  %v775 = vld [vmem:[%s1 + $0x250] sm:$0xff]
  %v776 = vld [vmem:[%s1 + $0x258] sm:$0xff]
  %v777 = vld [vmem:[%s1 + $0x260] sm:$0xff]
  %v778 = vld [vmem:[%s1 + $0x268] sm:$0xff]
  %v779 = vld [vmem:[%s1 + $0x270] sm:$0xff]
  %v780 = vld [vmem:[%s1 + $0x278] sm:$0xff]
  %v781 = vld [vmem:[%s1 + $0x280] sm:$0xff]
  %v782 = vld [vmem:[%s1 + $0x288] sm:$0xff]
  %v783 = vld [vmem:[%s1 + $0x290] sm:$0xff]
  %v784 = vld [vmem:[%s1 + $0x298] sm:$0xff]
  %v785 = vld [vmem:[%s1 + $0x2a0] sm:$0xff]
  %v786 = vld [vmem:[%s1 + $0x2a8] sm:$0xff]
  %v787 = vld [vmem:[%s1 + $0x2b0] sm:$0xff]
  %v788 = vld [vmem:[%s1 + $0x2b8] sm:$0xff]
  %v789 = vld [vmem:[%s1 + $0x2c0] sm:$0xff]
  %v790 = vld [vmem:[%s1 + $0x2c8] sm:$0xff]
  %v791 = vld [vmem:[%s1 + $0x2d0] sm:$0xff]
  %v792 = vld [vmem:[%s1 + $0x2d8] sm:$0xff]
  %v793 = vld [vmem:[%s1 + $0x2e0] sm:$0xff]
  %v794 = vld [vmem:[%s1 + $0x2e8] sm:$0xff]
  %v795 = vld [vmem:[%s1 + $0x2f0] sm:$0xff]
  %v796 = vld [vmem:[%s1 + $0x2f8] sm:$0xff]
  %v797 = vld [vmem:[%s1 + $0x300] sm:$0xff]
  %v798 = vld [vmem:[%s1 + $0x308] sm:$0xff]
  %v799 = vld [vmem:[%s1 + $0x310] sm:$0xff]
  %v800 = vld [vmem:[%s1 + $0x318] sm:$0xff]
  %v801 = vld [vmem:[%s1 + $0x320] sm:$0xff]
  %v802 = vld [vmem:[%s1 + $0x328] sm:$0xff]
  %v803 = vld [vmem:[%s1 + $0x330] sm:$0xff]
  %v804 = vld [vmem:[%s1 + $0x338] sm:$0xff]
  %v805 = vld [vmem:[%s1 + $0x340] sm:$0xff]
  %v806 = vld [vmem:[%s1 + $0x348] sm:$0xff]
  %v807 = vld [vmem:[%s1 + $0x350] sm:$0xff]
  %v808 = vld [vmem:[%s1 + $0x358] sm:$0xff]
  %v809 = vld [vmem:[%s1 + $0x360] sm:$0xff]
  %v810 = vld [vmem:[%s1 + $0x368] sm:$0xff]
  %v811 = vld [vmem:[%s1 + $0x370] sm:$0xff]
  %v812 = vld [vmem:[%s1 + $0x378] sm:$0xff]
  %v813 = vld [vmem:[%s1 + $0x380] sm:$0xff]
  %v814 = vld [vmem:[%s1 + $0x388] sm:$0xff]
  %v815 = vld [vmem:[%s1 + $0x390] sm:$0xff]
  %v816 = vld [vmem:[%s1 + $0x398] sm:$0xff]
  %v817 = vld [vmem:[%s1 + $0x3a0] sm:$0xff]
  %v818 = vld [vmem:[%s1 + $0x3a8] sm:$0xff]
  %v819 = vld [vmem:[%s1 + $0x3b0] sm:$0xff]
  %v820 = vld [vmem:[%s1 + $0x3b8] sm:$0xff]
  %v821 = vld [vmem:[%s1 + $0x3c0] sm:$0xff]
  %v822 = vld [vmem:[%s1 + $0x3c8] sm:$0xff]
  %v823 = vld [vmem:[%s1 + $0x3d0] sm:$0xff]
  %v824 = vld [vmem:[%s1 + $0x3d8] sm:$0xff]
  %v825 = vld [vmem:[%s1 + $0x3e0] sm:$0xff]
  %v826 = vld [vmem:[%s1 + $0x3e8] sm:$0xff]
  %v827 = vld [vmem:[%s1 + $0x3f0] sm:$0xff]
  %v828 = vld [vmem:[%s1 + $0x3f8] sm:$0xff]
  %v829 = vld [vmem:[%s1 + $0x400] sm:$0xff]
  %v830 = vld [vmem:[%s1 + $0x408] sm:$0xff]
  %v831 = vld [vmem:[%s1 + $0x410] sm:$0xff]
  %v832 = vld [vmem:[%s1 + $0x418] sm:$0xff]
  %v833 = vld [vmem:[%s1 + $0x420] sm:$0xff]
  %v834 = vld [vmem:[%s1 + $0x428] sm:$0xff]
  %v835 = vld [vmem:[%s1 + $0x430] sm:$0xff]
  %v836 = vld [vmem:[%s1 + $0x438] sm:$0xff]
  %v837 = vld [vmem:[%s1 + $0x440] sm:$0xff]
  %v838 = vld [vmem:[%s1 + $0x448] sm:$0xff]
  %v839 = vld [vmem:[%s1 + $0x450] sm:$0xff]
  %v840 = vld [vmem:[%s1 + $0x458] sm:$0xff]
  %v841 = vld [vmem:[%s1 + $0x460] sm:$0xff]
  %v842 = vld [vmem:[%s1 + $0x468] sm:$0xff]
  %v843 = vld [vmem:[%s1 + $0x470] sm:$0xff]
  %v844 = vld [vmem:[%s1 + $0x478] sm:$0xff]
  %v845 = vld [vmem:[%s1 + $0x480] sm:$0xff]
  %v846 = vld [vmem:[%s1 + $0x488] sm:$0xff]
  %v847 = vld [vmem:[%s1 + $0x490] sm:$0xff]
  %v848 = vld [vmem:[%s1 + $0x498] sm:$0xff]
  %v849 = vld [vmem:[%s1 + $0x4a0] sm:$0xff]
  %v850 = vld [vmem:[%s1 + $0x4a8] sm:$0xff]
  %v851 = vld [vmem:[%s1 + $0x4b0] sm:$0xff]
  %v852 = vld [vmem:[%s1 + $0x4b8] sm:$0xff]
  %v853 = vld [vmem:[%s1 + $0x4c0] sm:$0xff]
  %v854 = vld [vmem:[%s1 + $0x4c8] sm:$0xff]
  %v855 = vld [vmem:[%s1 + $0x4d0] sm:$0xff]
  %v856 = vld [vmem:[%s1 + $0x4d8] sm:$0xff]
  %v857 = vld [vmem:[%s1 + $0x4e0] sm:$0xff]
  %v858 = vld [vmem:[%s1 + $0x4e8] sm:$0xff]
  %v859 = vld [vmem:[%s1 + $0x4f0] sm:$0xff]
  %v860 = vld [vmem:[%s1 + $0x4f8] sm:$0xff]
  %v861 = vld [vmem:[%s1 + $0x500] sm:$0xff]
  %v862 = vld [vmem:[%s1 + $0x508] sm:$0xff]
  %v863 = vld [vmem:[%s1 + $0x510] sm:$0xff]
  %v864 = vld [vmem:[%s1 + $0x518] sm:$0xff]
  %v865 = vld [vmem:[%s1 + $0x520] sm:$0xff]
  %v866 = vld [vmem:[%s1 + $0x528] sm:$0xff]
  %v867 = vld [vmem:[%s1 + $0x530] sm:$0xff]
  %v868 = vld [vmem:[%s1 + $0x538] sm:$0xff]
  %v869 = vld [vmem:[%s1 + $0x540] sm:$0xff]
  %v870 = vld [vmem:[%s1 + $0x548] sm:$0xff]
  %v871 = vld [vmem:[%s1 + $0x550] sm:$0xff]
  %v872 = vld [vmem:[%s1 + $0x558] sm:$0xff]
  %v873 = vld [vmem:[%s1 + $0x560] sm:$0xff]
  %v874 = vld [vmem:[%s1 + $0x568] sm:$0xff]
  %v875 = vld [vmem:[%s1 + $0x570] sm:$0xff]
  %v876 = vld [vmem:[%s1 + $0x578] sm:$0xff]
  %v877 = vld [vmem:[%s1 + $0x580] sm:$0xff]
  %v878 = vld [vmem:[%s1 + $0x588] sm:$0xff]
  %v879 = vld [vmem:[%s1 + $0x590] sm:$0xff]
  %v880 = vld [vmem:[%s1 + $0x598] sm:$0xff]
  %v881 = vld [vmem:[%s1 + $0x5a0] sm:$0xff]
  %v882 = vld [vmem:[%s1 + $0x5a8] sm:$0xff]
  %v883 = vld [vmem:[%s1 + $0x5b0] sm:$0xff]
  %v884 = vld [vmem:[%s1 + $0x5b8] sm:$0xff]
  %v885 = vld [vmem:[%s1 + $0x5c0] sm:$0xff]
  %v886 = vld [vmem:[%s1 + $0x5c8] sm:$0xff]
  %v887 = vld [vmem:[%s1 + $0x5d0] sm:$0xff]
  %v888 = vld [vmem:[%s1 + $0x5d8] sm:$0xff]
  %v889 = vld [vmem:[%s1 + $0x5e0] sm:$0xff]
  %v890 = vld [vmem:[%s1 + $0x5e8] sm:$0xff]
  %v891 = vld [vmem:[%s1 + $0x5f0] sm:$0xff]
  %v892 = vld [vmem:[%s1 + $0x5f8] sm:$0xff]
  %v893 = vld [vmem:[%s1 + $0x600] sm:$0xff]
  %v894 = vld [vmem:[%s1 + $0x608] sm:$0xff]
  %v895 = vld [vmem:[%s1 + $0x610] sm:$0xff]
  %v896 = vld [vmem:[%s1 + $0x618] sm:$0xff]
  %v897 = vld [vmem:[%s1 + $0x620] sm:$0xff]
  %v898 = vld [vmem:[%s1 + $0x628] sm:$0xff]
  %v899 = vld [vmem:[%s1 + $0x630] sm:$0xff]
  %v900 = vld [vmem:[%s1 + $0x638] sm:$0xff]
  %v901 = vld [vmem:[%s1 + $0x640] sm:$0xff]
  %v902 = vld [vmem:[%s1 + $0x648] sm:$0xff]
  %v903 = vld [vmem:[%s1 + $0x650] sm:$0xff]
  %v904 = vld [vmem:[%s1 + $0x658] sm:$0xff]
  %v905 = vld [vmem:[%s1 + $0x660] sm:$0xff]
  %v906 = vld [vmem:[%s1 + $0x668] sm:$0xff]
  %v907 = vld [vmem:[%s1 + $0x670] sm:$0xff]
  %v908 = vld [vmem:[%s1 + $0x678] sm:$0xff]
  %v909 = vld [vmem:[%s1 + $0x680] sm:$0xff]
  %v910 = vld [vmem:[%s1 + $0x688] sm:$0xff]
  %v911 = vld [vmem:[%s1 + $0x690] sm:$0xff]
  %v912 = vld [vmem:[%s1 + $0x698] sm:$0xff]
  %v913 = vld [vmem:[%s1 + $0x6a0] sm:$0xff]
  %v914 = vld [vmem:[%s1 + $0x6a8] sm:$0xff]
  %v915 = vld [vmem:[%s1 + $0x6b0] sm:$0xff]
  %v916 = vld [vmem:[%s1 + $0x6b8] sm:$0xff]
  %v917 = vld [vmem:[%s1 + $0x6c0] sm:$0xff]
  %v918 = vld [vmem:[%s1 + $0x6c8] sm:$0xff]
  %v919 = vld [vmem:[%s1 + $0x6d0] sm:$0xff]
  %v920 = vld [vmem:[%s1 + $0x6d8] sm:$0xff]
  %v921 = vld [vmem:[%s1 + $0x6e0] sm:$0xff]
  %v922 = vld [vmem:[%s1 + $0x6e8] sm:$0xff]
  %v923 = vld [vmem:[%s1 + $0x6f0] sm:$0xff]
  %v924 = vld [vmem:[%s1 + $0x6f8] sm:$0xff]
  %v925 = vld [vmem:[%s1 + $0x700] sm:$0xff]
  %v926 = vld [vmem:[%s1 + $0x708] sm:$0xff]
  %v927 = vld [vmem:[%s1 + $0x710] sm:$0xff]
  %v928 = vld [vmem:[%s1 + $0x718] sm:$0xff]
  %v929 = vld [vmem:[%s1 + $0x720] sm:$0xff]
  %v930 = vld [vmem:[%s1 + $0x728] sm:$0xff]
  %v931 = vld [vmem:[%s1 + $0x730] sm:$0xff]
  %v932 = vld [vmem:[%s1 + $0x738] sm:$0xff]
  %v933 = vld [vmem:[%s1 + $0x740] sm:$0xff]
  %v934 = vld [vmem:[%s1 + $0x748] sm:$0xff]
  %v935 = vld [vmem:[%s1 + $0x750] sm:$0xff]
  %v936 = vld [vmem:[%s1 + $0x758] sm:$0xff]
  %v937 = vld [vmem:[%s1 + $0x760] sm:$0xff]
  %v938 = vld [vmem:[%s1 + $0x768] sm:$0xff]
  %v939 = vld [vmem:[%s1 + $0x770] sm:$0xff]
  %v940 = vld [vmem:[%s1 + $0x778] sm:$0xff]
  %v941 = vld [vmem:[%s1 + $0x780] sm:$0xff]
  %v942 = vld [vmem:[%s1 + $0x788] sm:$0xff]
  %v943 = vld [vmem:[%s1 + $0x790] sm:$0xff]
  %v944 = vld [vmem:[%s1 + $0x798] sm:$0xff]
  %v945 = vld [vmem:[%s1 + $0x7a0] sm:$0xff]
  %v946 = vld [vmem:[%s1 + $0x7a8] sm:$0xff]
  %v947 = vld [vmem:[%s1 + $0x7b0] sm:$0xff]
  %v948 = vld [vmem:[%s1 + $0x7b8] sm:$0xff]
  %v949 = vld [vmem:[%s1 + $0x7c0] sm:$0xff]
  %v950 = vld [vmem:[%s1 + $0x7c8] sm:$0xff]
  %v951 = vld [vmem:[%s1 + $0x7d0] sm:$0xff]
  %v952 = vld [vmem:[%s1 + $0x7d8] sm:$0xff]
  %v953 = vld [vmem:[%s1 + $0x7e0] sm:$0xff]
  %v954 = vld [vmem:[%s1 + $0x7e8] sm:$0xff]
  %v955 = vld [vmem:[%s1 + $0x7f0] sm:$0xff]
  %v956 = vld [vmem:[%s1 + $0x7f8] sm:$0xff]
  %v957 = vld [vmem:[%s1 + $0x800] sm:$0xff]
  %v958 = vld [vmem:[%s1 + $0x808] sm:$0xff]
  %v959 = vld [vmem:[%s1 + $0x810] sm:$0xff]
  %v960 = vld [vmem:[%s1 + $0x818] sm:$0xff]
  %v961 = vld [vmem:[%s1 + $0x820] sm:$0xff]
  %v962 = vld [vmem:[%s1 + $0x828] sm:$0xff]
  %v963 = vld [vmem:[%s1 + $0x830] sm:$0xff]
  %v964 = vld [vmem:[%s1 + $0x838] sm:$0xff]
  %v965 = vld [vmem:[%s1 + $0x840] sm:$0xff]
  %v966 = vld [vmem:[%s1 + $0x848] sm:$0xff]
  %v967 = vld [vmem:[%s1 + $0x850] sm:$0xff]
  %v968 = vld [vmem:[%s1 + $0x858] sm:$0xff]
  %v969 = vld [vmem:[%s1 + $0x860] sm:$0xff]
  %v970 = vld [vmem:[%s1 + $0x868] sm:$0xff]
  %v971 = vld [vmem:[%s1 + $0x870] sm:$0xff]
  %v972 = vld [vmem:[%s1 + $0x878] sm:$0xff]
  %v973 = vld [vmem:[%s1 + $0x880] sm:$0xff]
  %v974 = vld [vmem:[%s1 + $0x888] sm:$0xff]
  %v975 = vld [vmem:[%s1 + $0x890] sm:$0xff]
  %v976 = vld [vmem:[%s1 + $0x898] sm:$0xff]
  %v977 = vld [vmem:[%s1 + $0x8a0] sm:$0xff]
  %v978 = vld [vmem:[%s1 + $0x8a8] sm:$0xff]
  %v979 = vld [vmem:[%s1 + $0x8b0] sm:$0xff]
  %v980 = vld [vmem:[%s1 + $0x8b8] sm:$0xff]
  %v981 = vld [vmem:[%s1 + $0x8c0] sm:$0xff]
  %v982 = vld [vmem:[%s1 + $0x8c8] sm:$0xff]
  %v983 = vld [vmem:[%s1 + $0x8d0] sm:$0xff]
  %v984 = vld [vmem:[%s1 + $0x8d8] sm:$0xff]
  %v985 = vld [vmem:[%s1 + $0x8e0] sm:$0xff]
  %v986 = vld [vmem:[%s1 + $0x8e8] sm:$0xff]
  %v987 = vld [vmem:[%s1 + $0x8f0] sm:$0xff]
  %v988 = vld [vmem:[%s1 + $0x8f8] sm:$0xff]
  %v989 = vld [vmem:[%s1 + $0x900] sm:$0xff]
  %v990 = vld [vmem:[%s1 + $0x908] sm:$0xff]
  %v991 = vld [vmem:[%s1 + $0x910] sm:$0xff]
  %v992 = vld [vmem:[%s1 + $0x918] sm:$0xff]
  %v993 = vld [vmem:[%s1 + $0x920] sm:$0xff]
  %v994 = vld [vmem:[%s1 + $0x928] sm:$0xff]
  %v995 = vld [vmem:[%s1 + $0x930] sm:$0xff]
  %v996 = vld [vmem:[%s1 + $0x938] sm:$0xff]
  %v997 = vld [vmem:[%s1 + $0x940] sm:$0xff]
  %v998 = vld [vmem:[%s1 + $0x948] sm:$0xff]
  %v999 = vld [vmem:[%s1 + $0x950] sm:$0xff]
  %v1000 = vld [vmem:[%s1 + $0x958] sm:$0xff]
  %v1001 = vld [vmem:[%s1 + $0x960] sm:$0xff]
  %v1002 = vld [vmem:[%s1 + $0x968] sm:$0xff]
  %v1003 = vld [vmem:[%s1 + $0x970] sm:$0xff]
  %v1004 = vld [vmem:[%s1 + $0x978] sm:$0xff]
  %v1005 = vld [vmem:[%s1 + $0x980] sm:$0xff]
  %v1006 = vld [vmem:[%s1 + $0x988] sm:$0xff]
  %v1007 = vld [vmem:[%s1 + $0x990] sm:$0xff]
  %v1008 = vld [vmem:[%s1 + $0x998] sm:$0xff]
  %v1009 = vld [vmem:[%s1 + $0x9a0] sm:$0xff]
  %v1010 = vld [vmem:[%s1 + $0x9a8] sm:$0xff]
  %v1011 = vld [vmem:[%s1 + $0x9b0] sm:$0xff]
  %v1012 = vld [vmem:[%s1 + $0x9b8] sm:$0xff]
  %v1013 = vld [vmem:[%s1 + $0x9c0] sm:$0xff]
  %v1014 = vld [vmem:[%s1 + $0x9c8] sm:$0xff]
  %v1015 = vld [vmem:[%s1 + $0x9d0] sm:$0xff]
  %v1016 = vld [vmem:[%s1 + $0x9d8] sm:$0xff]
  %v1017 = vld [vmem:[%s1 + $0x9e0] sm:$0xff]
  %v1018 = vld [vmem:[%s1 + $0x9e8] sm:$0xff]
  %v1019 = vld [vmem:[%s1 + $0x9f0] sm:$0xff]
  %v1020 = vld [vmem:[%s1 + $0x9f8] sm:$0xff]
  %v1021 = vld [vmem:[%s1 + $0xa00] sm:$0xff]
  %v1022 = vld [vmem:[%s1 + $0xa08] sm:$0xff]
  %v1023 = vld [vmem:[%s1 + $0xa10] sm:$0xff]
  %v1024 = vld [vmem:[%s1 + $0xa18] sm:$0xff]
  %v1025 = vld [vmem:[%s1 + $0xa20] sm:$0xff]
  %v1026 = vld [vmem:[%s1 + $0xa28] sm:$0xff]
  %v1027 = vld [vmem:[%s1 + $0xa30] sm:$0xff]
  %v1028 = vld [vmem:[%s1 + $0xa38] sm:$0xff]
  %v1029 = vld [vmem:[%s1 + $0xa40] sm:$0xff]
  %v1030 = vld [vmem:[%s1 + $0xa48] sm:$0xff]
  %v1031 = vld [vmem:[%s1 + $0xa50] sm:$0xff]
  %v1032 = vld [vmem:[%s1 + $0xa58] sm:$0xff]
  %v1033 = vld [vmem:[%s1 + $0xa60] sm:$0xff]
  %v1034 = vld [vmem:[%s1 + $0xa68] sm:$0xff]
  %v1035 = vld [vmem:[%s1 + $0xa70] sm:$0xff]
  %v1036 = vld [vmem:[%s1 + $0xa78] sm:$0xff]
  %vm1037 = vcmask 523264
  %v1039 = vsel %vm1037, %v403, 0
  %v1042 = vsel %vm1037, %v414, 0
  %v1045 = vsel %vm1037, %v425, 0
  %v1048 = vsel %vm1037, %v436, 0
  %v1051 = vsel %vm1037, %v447, 0
  %v1054 = vsel %vm1037, %v458, 0
  %v1057 = vsel %vm1037, %v469, 0
  %v1060 = vsel %vm1037, %v480, 0
  %v1063 = vsel %vm1037, %v491, 0
  %v1066 = vsel %vm1037, %v502, 0
  %v1069 = vsel %vm1037, %v513, 0
  %v1072 = vsel %vm1037, %v524, 0
  %v1075 = vsel %vm1037, %v535, 0
  %v1078 = vsel %vm1037, %v546, 0
  %v1081 = vsel %vm1037, %v557, 0
  %v1084 = vsel %vm1037, %v568, 0
  %v1087 = vsel %vm1037, %v579, 0
  %v1090 = vsel %vm1037, %v590, 0
  %v1093 = vsel %vm1037, %v601, 0
  %v1096 = vsel %vm1037, %v612, 0
  %v1099 = vsel %vm1037, %v623, 0
  %v1102 = vsel %vm1037, %v634, 0
  %v1105 = vsel %vm1037, %v645, 0
  %v1108 = vsel %vm1037, %v656, 0
  %v1111 = vsel %vm1037, %v667, 0
  %v1114 = vsel %vm1037, %v678, 0
  %v1117 = vsel %vm1037, %v689, 0
  %v1120 = vsel %vm1037, %v700, 0
  %1122 = vmatprep.subr.mxu0 %v702
  %1123 = vmatpush1.msra.mxu0 %v701
  %1124 = vmatprep.subr.mxu0 %v704
  %1125 = vmatpush1.msra.mxu0 %v703
  %1126 = vmatprep.subr.mxu0 %v706
  %1127 = vmatpush1.msra.mxu0 %v705
  %1128 = vmatprep.subr.mxu0 %v708
  %1129 = vmatpush1.msra.mxu0 %v707
  %1130 = vmatprep.subr.mxu0 %v710
  %1131 = vmatpush1.msra.mxu0 %v709
  %1132 = vmatprep.subr.mxu0 %v712
  %1133 = vmatpush1.msra.mxu0 %v711
  %1134 = vmatprep.subr.mxu0 %v714
  %1135 = vmatpush1.msra.mxu0 %v713
  %1136 = vmatprep.subr.mxu0 %v716
  %1137 = vmatpush1.msra.mxu0 %v715
  %1138 = vmatprep.subr.mxu0 %v718
  %1139 = vmatpush1.msra.mxu0 %v717
  %1140 = vmatprep.subr.mxu0 %v720
  %1141 = vmatpush1.msra.mxu0 %v719
  %1142 = vmatprep.subr.mxu0 %v722
  %1143 = vmatpush1.msra.mxu0 %v721
  %1144 = vmatprep.subr.mxu0 %v724
  %1145 = vmatpush1.msra.mxu0 %v723
  %1146 = vmatprep.subr.mxu0 %v726
  %1147 = vmatpush1.msra.mxu0 %v725
  %1148 = vmatprep.subr.mxu0 %v728
  %1149 = vmatpush1.msra.mxu0 %v727
  %1150 = vmatprep.subr.mxu0 %v730
  %1151 = vmatpush1.msra.mxu0 %v729
  %1152 = vmatprep.subr.mxu0 %v732
  %1153 = vmatpush1.msra.mxu0 %v731
  %1154 = vmatprep.subr.mxu0 %v734
  %1155 = vmatpush1.msra.mxu0 %v733
  %1156 = vmatprep.subr.mxu0 %v736
  %1157 = vmatpush1.msra.mxu0 %v735
  %1158 = vmatprep.subr.mxu0 %v738
  %1159 = vmatpush1.msra.mxu0 %v737
  %1160 = vmatprep.subr.mxu0 %v740
  %1161 = vmatpush1.msra.mxu0 %v739
  %1162 = vmatprep.subr.mxu0 %v742
  %1163 = vmatpush1.msra.mxu0 %v741
  %1164 = vmatprep.subr.mxu0 %v744
  %1165 = vmatpush1.msra.mxu0 %v743
  %1166 = vmatprep.subr.mxu0 %v746
  %1167 = vmatpush1.msra.mxu0 %v745
  %1168 = vmatprep.subr.mxu0 %v748
  %1169 = vmatpush1.msra.mxu0 %v747
  %1170 = vmatprep.subr.mxu0 %v750
  %1171 = vmatpush1.msra.mxu0 %v749
  %1172 = vmatprep.subr.mxu0 %v752
  %1173 = vmatpush1.msra.mxu0 %v751
  %1174 = vmatprep.subr.mxu0 %v754
  %1175 = vmatpush1.msra.mxu0 %v753
  %1176 = vmatprep.subr.mxu0 %v756
  %1177 = vmatpush1.msra.mxu0 %v755
  %1178 = vmatprep.subr.mxu0 %v758
  %1179 = vmatpush1.msra.mxu0 %v757
  %1180 = vmatprep.subr.mxu0 %v760
  %1181 = vmatpush1.msra.mxu0 %v759
  %1182 = vmatprep.subr.mxu0 %v762
  %1183 = vmatpush1.msra.mxu0 %v761
  %1184 = vmatprep.subr.mxu0 %v764
  %1185 = vmatpush1.msra.mxu0 %v763
  %1186 = vmatprep.mubr.f32.mxu0 %v394
  %1187 = vmatmul.mubr.f32.gmra.mrb[0].mxu0 %v393
  %v1188 = vpop.f32.mrb[0].mxu0
  %v1189 = vadd.f32 0.0, %v1188
  %v1190 = vpop.f32.mrb[0].mxu0
  %v1191 = vadd.f32 0.0, %v1190
  %1192 = vmatprep.mubr.f32.mxu0 %v405
  %1193 = vmatmul.mubr.f32.gmra.mrb[0].mxu0 %v404
  %v1194 = vpop.f32.mrb[0].mxu0
  %v1195 = vadd.f32 0.0, %v1194
  %v1196 = vpop.f32.mrb[0].mxu0
  %v1197 = vadd.f32 0.0, %v1196
  %1198 = vmatprep.mubr.f32.mxu0 %v416
  %1199 = vmatmul.mubr.f32.gmra.mrb[0].mxu0 %v415
  %v1200 = vpop.f32.mrb[0].mxu0
  %v1201 = vadd.f32 0.0, %v1200
  %v1202 = vpop.f32.mrb[0].mxu0
  %v1203 = vadd.f32 0.0, %v1202
  %1204 = vmatprep.mubr.f32.mxu0 %v427
  %1205 = vmatmul.mubr.f32.gmra.mrb[0].mxu0 %v426
  %v1206 = vpop.f32.mrb[0].mxu0
  %v1207 = vadd.f32 0.0, %v1206
  %v1208 = vpop.f32.mrb[0].mxu0
  %v1209 = vadd.f32 0.0, %v1208
  %1210 = vmatprep.mubr.f32.mxu0 %v438
  %1211 = vmatmul.mubr.f32.gmra.mrb[0].mxu0 %v437
  %v1212 = vpop.f32.mrb[0].mxu0
  %v1213 = vadd.f32 0.0, %v1212
  %v1214 = vpop.f32.mrb[0].mxu0
  %v1215 = vadd.f32 0.0, %v1214
  %1216 = vmatprep.mubr.f32.mxu0 %v449
  %1217 = vmatmul.mubr.f32.gmra.mrb[0].mxu0 %v448
  %v1218 = vpop.f32.mrb[0].mxu0
  %v1219 = vadd.f32 0.0, %v1218
  %v1220 = vpop.f32.mrb[0].mxu0
  %v1221 = vadd.f32 0.0, %v1220
  %1222 = vmatprep.mubr.f32.mxu0 %v460
  %1223 = vmatmul.mubr.f32.gmra.mrb[0].mxu0 %v459
  %v1224 = vpop.f32.mrb[0].mxu0
  %v1225 = vadd.f32 0.0, %v1224
  %v1226 = vpop.f32.mrb[0].mxu0
  %v1227 = vadd.f32 0.0, %v1226
  %1228 = vmatprep.mubr.f32.mxu0 %v471
  %1229 = vmatmul.mubr.f32.gmra.mrb[0].mxu0 %v470
  %v1230 = vpop.f32.mrb[0].mxu0
  %v1231 = vadd.f32 0.0, %v1230
  %v1232 = vpop.f32.mrb[0].mxu0
  %v1233 = vadd.f32 0.0, %v1232
  %1234 = vmatprep.mubr.f32.mxu0 %v482
  %1235 = vmatmul.mubr.f32.gmra.mrb[0].mxu0 %v481
  %v1236 = vpop.f32.mrb[0].mxu0
  %v1237 = vadd.f32 0.0, %v1236
  %v1238 = vpop.f32.mrb[0].mxu0
  %v1239 = vadd.f32 0.0, %v1238
  %1240 = vmatprep.mubr.f32.mxu0 %v493
  %1241 = vmatmul.mubr.f32.gmra.mrb[0].mxu0 %v492
  %v1242 = vpop.f32.mrb[0].mxu0
  %v1243 = vadd.f32 0.0, %v1242
  %v1244 = vpop.f32.mrb[0].mxu0
  %v1245 = vadd.f32 0.0, %v1244
  %1246 = vmatprep.mubr.f32.mxu0 %v504
  %1247 = vmatmul.mubr.f32.gmra.mrb[0].mxu0 %v503
  %v1248 = vpop.f32.mrb[0].mxu0
  %v1249 = vadd.f32 0.0, %v1248
  %v1250 = vpop.f32.mrb[0].mxu0
  %v1251 = vadd.f32 0.0, %v1250
  %1252 = vmatprep.mubr.f32.mxu0 %v515
  %1253 = vmatmul.mubr.f32.gmra.mrb[0].mxu0 %v514
  %v1254 = vpop.f32.mrb[0].mxu0
  %v1255 = vadd.f32 0.0, %v1254
  %v1256 = vpop.f32.mrb[0].mxu0
  %v1257 = vadd.f32 0.0, %v1256
  %1258 = vmatprep.mubr.f32.mxu0 %v526
  %1259 = vmatmul.mubr.f32.gmra.mrb[0].mxu0 %v525
  %v1260 = vpop.f32.mrb[0].mxu0
  %v1261 = vadd.f32 0.0, %v1260
  %v1262 = vpop.f32.mrb[0].mxu0
  %v1263 = vadd.f32 0.0, %v1262
  %1264 = vmatprep.mubr.f32.mxu0 %v537
  %1265 = vmatmul.mubr.f32.gmra.mrb[0].mxu0 %v536
  %v1266 = vpop.f32.mrb[0].mxu0
  %v1267 = vadd.f32 0.0, %v1266
  %v1268 = vpop.f32.mrb[0].mxu0
  %v1269 = vadd.f32 0.0, %v1268
  %1270 = vmatprep.mubr.f32.mxu0 %v548
  %1271 = vmatmul.mubr.f32.gmra.mrb[0].mxu0 %v547
  %v1272 = vpop.f32.mrb[0].mxu0
  %v1273 = vadd.f32 0.0, %v1272
  %v1274 = vpop.f32.mrb[0].mxu0
  %v1275 = vadd.f32 0.0, %v1274
  %1276 = vmatprep.mubr.f32.mxu0 %v559
  %1277 = vmatmul.mubr.f32.gmra.mrb[0].mxu0 %v558
  %v1278 = vpop.f32.mrb[0].mxu0
  %v1279 = vadd.f32 0.0, %v1278
  %v1280 = vpop.f32.mrb[0].mxu0
  %v1281 = vadd.f32 0.0, %v1280
  %1282 = vmatprep.mubr.f32.mxu0 %v570
  %1283 = vmatmul.mubr.f32.gmra.mrb[0].mxu0 %v569
  %v1284 = vpop.f32.mrb[0].mxu0
  %v1285 = vadd.f32 0.0, %v1284
  %v1286 = vpop.f32.mrb[0].mxu0
  %v1287 = vadd.f32 0.0, %v1286
  %1288 = vmatprep.mubr.f32.mxu0 %v581
  %1289 = vmatmul.mubr.f32.gmra.mrb[0].mxu0 %v580
  %v1290 = vpop.f32.mrb[0].mxu0
  %v1291 = vadd.f32 0.0, %v1290
  %v1292 = vpop.f32.mrb[0].mxu0
  %v1293 = vadd.f32 0.0, %v1292
  %1294 = vmatprep.mubr.f32.mxu0 %v592
  %1295 = vmatmul.mubr.f32.gmra.mrb[0].mxu0 %v591
  %v1296 = vpop.f32.mrb[0].mxu0
  %v1297 = vadd.f32 0.0, %v1296
  %v1298 = vpop.f32.mrb[0].mxu0
  %v1299 = vadd.f32 0.0, %v1298
  %1300 = vmatprep.mubr.f32.mxu0 %v603
  %1301 = vmatmul.mubr.f32.gmra.mrb[0].mxu0 %v602
  %v1302 = vpop.f32.mrb[0].mxu0
  %v1303 = vadd.f32 0.0, %v1302
  %v1304 = vpop.f32.mrb[0].mxu0
  %v1305 = vadd.f32 0.0, %v1304
  %1306 = vmatprep.mubr.f32.mxu0 %v614
  %1307 = vmatmul.mubr.f32.gmra.mrb[0].mxu0 %v613
  %v1308 = vpop.f32.mrb[0].mxu0
  %v1309 = vadd.f32 0.0, %v1308
  %v1310 = vpop.f32.mrb[0].mxu0
  %v1311 = vadd.f32 0.0, %v1310
  %1312 = vmatprep.mubr.f32.mxu0 %v625
  %1313 = vmatmul.mubr.f32.gmra.mrb[0].mxu0 %v624
  %v1314 = vpop.f32.mrb[0].mxu0
  %v1315 = vadd.f32 0.0, %v1314
  %v1316 = vpop.f32.mrb[0].mxu0
  %v1317 = vadd.f32 0.0, %v1316
  %1318 = vmatprep.mubr.f32.mxu0 %v636
  %1319 = vmatmul.mubr.f32.gmra.mrb[0].mxu0 %v635
  %v1320 = vpop.f32.mrb[0].mxu0
  %v1321 = vadd.f32 0.0, %v1320
  %v1322 = vpop.f32.mrb[0].mxu0
  %v1323 = vadd.f32 0.0, %v1322
  %1324 = vmatprep.mubr.f32.mxu0 %v647
  %1325 = vmatmul.mubr.f32.gmra.mrb[0].mxu0 %v646
  %v1326 = vpop.f32.mrb[0].mxu0
  %v1327 = vadd.f32 0.0, %v1326
  %v1328 = vpop.f32.mrb[0].mxu0
  %v1329 = vadd.f32 0.0, %v1328
  %1330 = vmatprep.mubr.f32.mxu0 %v658
  %1331 = vmatmul.mubr.f32.gmra.mrb[0].mxu0 %v657
  %v1332 = vpop.f32.mrb[0].mxu0
  %v1333 = vadd.f32 0.0, %v1332
  %v1334 = vpop.f32.mrb[0].mxu0
  %v1335 = vadd.f32 0.0, %v1334
  %1336 = vmatprep.mubr.f32.mxu0 %v669
  %1337 = vmatmul.mubr.f32.gmra.mrb[0].mxu0 %v668
  %v1338 = vpop.f32.mrb[0].mxu0
  %v1339 = vadd.f32 0.0, %v1338
  %v1340 = vpop.f32.mrb[0].mxu0
  %v1341 = vadd.f32 0.0, %v1340
  %1342 = vmatprep.mubr.f32.mxu0 %v680
  %1343 = vmatmul.mubr.f32.gmra.mrb[0].mxu0 %v679
  %v1344 = vpop.f32.mrb[0].mxu0
  %v1345 = vadd.f32 0.0, %v1344
  %v1346 = vpop.f32.mrb[0].mxu0
  %v1347 = vadd.f32 0.0, %v1346
  %1348 = vmatprep.mubr.f32.mxu0 %v691
  %1349 = vmatmul.mubr.f32.gmra.mrb[0].mxu0 %v690
  %v1350 = vpop.f32.mrb[0].mxu0
  %v1351 = vadd.f32 0.0, %v1350
  %v1352 = vpop.f32.mrb[0].mxu0
  %v1353 = vadd.f32 0.0, %v1352
  %1354 = vdwg.mxu0
  %1355 = vmatprep.subr.mxu0 %v766
  %1356 = vmatpush1.msra.mxu0 %v765
  %1357 = vmatprep.subr.mxu0 %v768
  %1358 = vmatpush1.msra.mxu0 %v767
  %1359 = vmatprep.subr.mxu0 %v770
  %1360 = vmatpush1.msra.mxu0 %v769
  %1361 = vmatprep.subr.mxu0 %v772
  %1362 = vmatpush1.msra.mxu0 %v771
  %1363 = vmatprep.subr.mxu0 %v774
  %1364 = vmatpush1.msra.mxu0 %v773
  %1365 = vmatprep.subr.mxu0 %v776
  %1366 = vmatpush1.msra.mxu0 %v775
  %1367 = vmatprep.subr.mxu0 %v778
  %1368 = vmatpush1.msra.mxu0 %v777
  %1369 = vmatprep.subr.mxu0 %v780
  %1370 = vmatpush1.msra.mxu0 %v779
  %1371 = vmatprep.subr.mxu0 %v782
  %1372 = vmatpush1.msra.mxu0 %v781
  %1373 = vmatprep.subr.mxu0 %v784
  %1374 = vmatpush1.msra.mxu0 %v783
  %1375 = vmatprep.subr.mxu0 %v786
  %1376 = vmatpush1.msra.mxu0 %v785
  %1377 = vmatprep.subr.mxu0 %v788
  %1378 = vmatpush1.msra.mxu0 %v787
  %1379 = vmatprep.subr.mxu0 %v790
  %1380 = vmatpush1.msra.mxu0 %v789
  %1381 = vmatprep.subr.mxu0 %v792
  %1382 = vmatpush1.msra.mxu0 %v791
  %1383 = vmatprep.subr.mxu0 %v794
  %1384 = vmatpush1.msra.mxu0 %v793
  %1385 = vmatprep.subr.mxu0 %v796
  %1386 = vmatpush1.msra.mxu0 %v795
  %1387 = vmatprep.subr.mxu0 %v798
  %1388 = vmatpush1.msra.mxu0 %v797
  %1389 = vmatprep.subr.mxu0 %v800
  %1390 = vmatpush1.msra.mxu0 %v799
  %1391 = vmatprep.subr.mxu0 %v802
  %1392 = vmatpush1.msra.mxu0 %v801
  %1393 = vmatprep.subr.mxu0 %v804
  %1394 = vmatpush1.msra.mxu0 %v803
  %1395 = vmatprep.subr.mxu0 %v806
  %1396 = vmatpush1.msra.mxu0 %v805
  %1397 = vmatprep.subr.mxu0 %v808
  %1398 = vmatpush1.msra.mxu0 %v807
  %1399 = vmatprep.subr.mxu0 %v810
  %1400 = vmatpush1.msra.mxu0 %v809
  %1401 = vmatprep.subr.mxu0 %v812
  %1402 = vmatpush1.msra.mxu0 %v811
  %1403 = vmatprep.subr.mxu0 %v814
  %1404 = vmatpush1.msra.mxu0 %v813
  %1405 = vmatprep.subr.mxu0 %v816
  %1406 = vmatpush1.msra.mxu0 %v815
  %1407 = vmatprep.subr.mxu0 %v818
  %1408 = vmatpush1.msra.mxu0 %v817
  %1409 = vmatprep.subr.mxu0 %v820
  %1410 = vmatpush1.msra.mxu0 %v819
  %1411 = vmatprep.subr.mxu0 %v822
  %1412 = vmatpush1.msra.mxu0 %v821
  %1413 = vmatprep.subr.mxu0 %v824
  %1414 = vmatpush1.msra.mxu0 %v823
  %1415 = vmatprep.subr.mxu0 %v826
  %1416 = vmatpush1.msra.mxu0 %v825
  %1417 = vmatprep.subr.mxu0 %v828
  %1418 = vmatpush1.msra.mxu0 %v827
  %1419 = vmatprep.mubr.f32.mxu0 %v396
  %1420 = vmatmul.mubr.f32.gmra.mrb[0].mxu0 %v395
  %v1421 = vpop.f32.mrb[0].mxu0
  %v1422 = vadd.f32 %v1189, %v1421
  %v1423 = vpop.f32.mrb[0].mxu0
  %v1424 = vadd.f32 %v1191, %v1423
  %1425 = vmatprep.mubr.f32.mxu0 %v407
  %1426 = vmatmul.mubr.f32.gmra.mrb[0].mxu0 %v406
  %v1427 = vpop.f32.mrb[0].mxu0
  %v1428 = vadd.f32 %v1195, %v1427
  %v1429 = vpop.f32.mrb[0].mxu0
  %v1430 = vadd.f32 %v1197, %v1429
  %1431 = vmatprep.mubr.f32.mxu0 %v418
  %1432 = vmatmul.mubr.f32.gmra.mrb[0].mxu0 %v417
  %v1433 = vpop.f32.mrb[0].mxu0
  %v1434 = vadd.f32 %v1201, %v1433
  %v1435 = vpop.f32.mrb[0].mxu0
  %v1436 = vadd.f32 %v1203, %v1435
  %1437 = vmatprep.mubr.f32.mxu0 %v429
  %1438 = vmatmul.mubr.f32.gmra.mrb[0].mxu0 %v428
  %v1439 = vpop.f32.mrb[0].mxu0
  %v1440 = vadd.f32 %v1207, %v1439
  %v1441 = vpop.f32.mrb[0].mxu0
  %v1442 = vadd.f32 %v1209, %v1441
  %1443 = vmatprep.mubr.f32.mxu0 %v440
  %1444 = vmatmul.mubr.f32.gmra.mrb[0].mxu0 %v439
  %v1445 = vpop.f32.mrb[0].mxu0
  %v1446 = vadd.f32 %v1213, %v1445
  %v1447 = vpop.f32.mrb[0].mxu0
  %v1448 = vadd.f32 %v1215, %v1447
  %1449 = vmatprep.mubr.f32.mxu0 %v451
  %1450 = vmatmul.mubr.f32.gmra.mrb[0].mxu0 %v450
  %v1451 = vpop.f32.mrb[0].mxu0
  %v1452 = vadd.f32 %v1219, %v1451
  %v1453 = vpop.f32.mrb[0].mxu0
  %v1454 = vadd.f32 %v1221, %v1453
  %1455 = vmatprep.mubr.f32.mxu0 %v462
  %1456 = vmatmul.mubr.f32.gmra.mrb[0].mxu0 %v461
  %v1457 = vpop.f32.mrb[0].mxu0
  %v1458 = vadd.f32 %v1225, %v1457
  %v1459 = vpop.f32.mrb[0].mxu0
  %v1460 = vadd.f32 %v1227, %v1459
  %1461 = vmatprep.mubr.f32.mxu0 %v473
  %1462 = vmatmul.mubr.f32.gmra.mrb[0].mxu0 %v472
  %v1463 = vpop.f32.mrb[0].mxu0
  %v1464 = vadd.f32 %v1231, %v1463
  %v1465 = vpop.f32.mrb[0].mxu0
  %v1466 = vadd.f32 %v1233, %v1465
  %1467 = vmatprep.mubr.f32.mxu0 %v484
  %1468 = vmatmul.mubr.f32.gmra.mrb[0].mxu0 %v483
  %v1469 = vpop.f32.mrb[0].mxu0
  %v1470 = vadd.f32 %v1237, %v1469
  %v1471 = vpop.f32.mrb[0].mxu0
  %v1472 = vadd.f32 %v1239, %v1471
  %1473 = vmatprep.mubr.f32.mxu0 %v495
  %1474 = vmatmul.mubr.f32.gmra.mrb[0].mxu0 %v494
  %v1475 = vpop.f32.mrb[0].mxu0
  %v1476 = vadd.f32 %v1243, %v1475
  %v1477 = vpop.f32.mrb[0].mxu0
  %v1478 = vadd.f32 %v1245, %v1477
  %1479 = vmatprep.mubr.f32.mxu0 %v506
  %1480 = vmatmul.mubr.f32.gmra.mrb[0].mxu0 %v505
  %v1481 = vpop.f32.mrb[0].mxu0
  %v1482 = vadd.f32 %v1249, %v1481
  %v1483 = vpop.f32.mrb[0].mxu0
  %v1484 = vadd.f32 %v1251, %v1483
  %1485 = vmatprep.mubr.f32.mxu0 %v517
  %1486 = vmatmul.mubr.f32.gmra.mrb[0].mxu0 %v516
  %v1487 = vpop.f32.mrb[0].mxu0
  %v1488 = vadd.f32 %v1255, %v1487
  %v1489 = vpop.f32.mrb[0].mxu0
  %v1490 = vadd.f32 %v1257, %v1489
  %1491 = vmatprep.mubr.f32.mxu0 %v528
  %1492 = vmatmul.mubr.f32.gmra.mrb[0].mxu0 %v527
  %v1493 = vpop.f32.mrb[0].mxu0
  %v1494 = vadd.f32 %v1261, %v1493
  %v1495 = vpop.f32.mrb[0].mxu0
  %v1496 = vadd.f32 %v1263, %v1495
  %1497 = vmatprep.mubr.f32.mxu0 %v539
  %1498 = vmatmul.mubr.f32.gmra.mrb[0].mxu0 %v538
  %v1499 = vpop.f32.mrb[0].mxu0
  %v1500 = vadd.f32 %v1267, %v1499
  %v1501 = vpop.f32.mrb[0].mxu0
  %v1502 = vadd.f32 %v1269, %v1501
  %1503 = vmatprep.mubr.f32.mxu0 %v550
  %1504 = vmatmul.mubr.f32.gmra.mrb[0].mxu0 %v549
  %v1505 = vpop.f32.mrb[0].mxu0
  %v1506 = vadd.f32 %v1273, %v1505
  %v1507 = vpop.f32.mrb[0].mxu0
  %v1508 = vadd.f32 %v1275, %v1507
  %1509 = vmatprep.mubr.f32.mxu0 %v561
  %1510 = vmatmul.mubr.f32.gmra.mrb[0].mxu0 %v560
  %v1511 = vpop.f32.mrb[0].mxu0
  %v1512 = vadd.f32 %v1279, %v1511
  %v1513 = vpop.f32.mrb[0].mxu0
  %v1514 = vadd.f32 %v1281, %v1513
  %1515 = vmatprep.mubr.f32.mxu0 %v572
  %1516 = vmatmul.mubr.f32.gmra.mrb[0].mxu0 %v571
  %v1517 = vpop.f32.mrb[0].mxu0
  %v1518 = vadd.f32 %v1285, %v1517
  %v1519 = vpop.f32.mrb[0].mxu0
  %v1520 = vadd.f32 %v1287, %v1519
  %1521 = vmatprep.mubr.f32.mxu0 %v583
  %1522 = vmatmul.mubr.f32.gmra.mrb[0].mxu0 %v582
  %v1523 = vpop.f32.mrb[0].mxu0
  %v1524 = vadd.f32 %v1291, %v1523
  %v1525 = vpop.f32.mrb[0].mxu0
  %v1526 = vadd.f32 %v1293, %v1525
  %1527 = vmatprep.mubr.f32.mxu0 %v594
  %1528 = vmatmul.mubr.f32.gmra.mrb[0].mxu0 %v593
  %v1529 = vpop.f32.mrb[0].mxu0
  %v1530 = vadd.f32 %v1297, %v1529
  %v1531 = vpop.f32.mrb[0].mxu0
  %v1532 = vadd.f32 %v1299, %v1531
  %1533 = vmatprep.mubr.f32.mxu0 %v605
  %1534 = vmatmul.mubr.f32.gmra.mrb[0].mxu0 %v604
  %v1535 = vpop.f32.mrb[0].mxu0
  %v1536 = vadd.f32 %v1303, %v1535
  %v1537 = vpop.f32.mrb[0].mxu0
  %v1538 = vadd.f32 %v1305, %v1537
  %1539 = vmatprep.mubr.f32.mxu0 %v616
  %1540 = vmatmul.mubr.f32.gmra.mrb[0].mxu0 %v615
  %v1541 = vpop.f32.mrb[0].mxu0
  %v1542 = vadd.f32 %v1309, %v1541
  %v1543 = vpop.f32.mrb[0].mxu0
  %v1544 = vadd.f32 %v1311, %v1543
  %1545 = vmatprep.mubr.f32.mxu0 %v627
  %1546 = vmatmul.mubr.f32.gmra.mrb[0].mxu0 %v626
  %v1547 = vpop.f32.mrb[0].mxu0
  %v1548 = vadd.f32 %v1315, %v1547
  %v1549 = vpop.f32.mrb[0].mxu0
  %v1550 = vadd.f32 %v1317, %v1549
  %1551 = vmatprep.mubr.f32.mxu0 %v638
  %1552 = vmatmul.mubr.f32.gmra.mrb[0].mxu0 %v637
  %v1553 = vpop.f32.mrb[0].mxu0
  %v1554 = vadd.f32 %v1321, %v1553
  %v1555 = vpop.f32.mrb[0].mxu0
  %v1556 = vadd.f32 %v1323, %v1555
  %1557 = vmatprep.mubr.f32.mxu0 %v649
  %1558 = vmatmul.mubr.f32.gmra.mrb[0].mxu0 %v648
  %v1559 = vpop.f32.mrb[0].mxu0
  %v1560 = vadd.f32 %v1327, %v1559
  %v1561 = vpop.f32.mrb[0].mxu0
  %v1562 = vadd.f32 %v1329, %v1561
  %1563 = vmatprep.mubr.f32.mxu0 %v660
  %1564 = vmatmul.mubr.f32.gmra.mrb[0].mxu0 %v659
  %v1565 = vpop.f32.mrb[0].mxu0
  %v1566 = vadd.f32 %v1333, %v1565
  %v1567 = vpop.f32.mrb[0].mxu0
  %v1568 = vadd.f32 %v1335, %v1567
  %1569 = vmatprep.mubr.f32.mxu0 %v671
  %1570 = vmatmul.mubr.f32.gmra.mrb[0].mxu0 %v670
  %v1571 = vpop.f32.mrb[0].mxu0
  %v1572 = vadd.f32 %v1339, %v1571
  %v1573 = vpop.f32.mrb[0].mxu0
  %v1574 = vadd.f32 %v1341, %v1573
  %1575 = vmatprep.mubr.f32.mxu0 %v682
  %1576 = vmatmul.mubr.f32.gmra.mrb[0].mxu0 %v681
  %v1577 = vpop.f32.mrb[0].mxu0
  %v1578 = vadd.f32 %v1345, %v1577
  %v1579 = vpop.f32.mrb[0].mxu0
  %v1580 = vadd.f32 %v1347, %v1579
  %1581 = vmatprep.mubr.f32.mxu0 %v693
  %1582 = vmatmul.mubr.f32.gmra.mrb[0].mxu0 %v692
  %v1583 = vpop.f32.mrb[0].mxu0
  %v1584 = vadd.f32 %v1351, %v1583
  %v1585 = vpop.f32.mrb[0].mxu0
  %v1586 = vadd.f32 %v1353, %v1585
  %1587 = vdwg.mxu0
  %1588 = vmatprep.subr.mxu0 %v830
  %1589 = vmatpush1.msra.mxu0 %v829
  %1590 = vmatprep.subr.mxu0 %v832
  %1591 = vmatpush1.msra.mxu0 %v831
  %1592 = vmatprep.subr.mxu0 %v834
  %1593 = vmatpush1.msra.mxu0 %v833
  %1594 = vmatprep.subr.mxu0 %v836
  %1595 = vmatpush1.msra.mxu0 %v835
  %1596 = vmatprep.subr.mxu0 %v838
  %1597 = vmatpush1.msra.mxu0 %v837
  %1598 = vmatprep.subr.mxu0 %v840
  %1599 = vmatpush1.msra.mxu0 %v839
  %1600 = vmatprep.subr.mxu0 %v842
  %1601 = vmatpush1.msra.mxu0 %v841
  %1602 = vmatprep.subr.mxu0 %v844
  %1603 = vmatpush1.msra.mxu0 %v843
  %1604 = vmatprep.subr.mxu0 %v846
  %1605 = vmatpush1.msra.mxu0 %v845
  %1606 = vmatprep.subr.mxu0 %v848
  %1607 = vmatpush1.msra.mxu0 %v847
  %1608 = vmatprep.subr.mxu0 %v850
  %1609 = vmatpush1.msra.mxu0 %v849
  %1610 = vmatprep.subr.mxu0 %v852
  %1611 = vmatpush1.msra.mxu0 %v851
  %1612 = vmatprep.subr.mxu0 %v854
  %1613 = vmatpush1.msra.mxu0 %v853
  %1614 = vmatprep.subr.mxu0 %v856
  %1615 = vmatpush1.msra.mxu0 %v855
  %1616 = vmatprep.subr.mxu0 %v858
  %1617 = vmatpush1.msra.mxu0 %v857
  %1618 = vmatprep.subr.mxu0 %v860
  %1619 = vmatpush1.msra.mxu0 %v859
  %1620 = vmatprep.subr.mxu0 %v862
  %1621 = vmatpush1.msra.mxu0 %v861
  %1622 = vmatprep.subr.mxu0 %v864
  %1623 = vmatpush1.msra.mxu0 %v863
  %1624 = vmatprep.subr.mxu0 %v866
  %1625 = vmatpush1.msra.mxu0 %v865
  %1626 = vmatprep.subr.mxu0 %v868
  %1627 = vmatpush1.msra.mxu0 %v867
  %1628 = vmatprep.subr.mxu0 %v870
  %1629 = vmatpush1.msra.mxu0 %v869
  %1630 = vmatprep.subr.mxu0 %v872
  %1631 = vmatpush1.msra.mxu0 %v871
  %1632 = vmatprep.subr.mxu0 %v874
  %1633 = vmatpush1.msra.mxu0 %v873
  %1634 = vmatprep.subr.mxu0 %v876
  %1635 = vmatpush1.msra.mxu0 %v875
  %1636 = vmatprep.subr.mxu0 %v878
  %1637 = vmatpush1.msra.mxu0 %v877
  %1638 = vmatprep.subr.mxu0 %v880
  %1639 = vmatpush1.msra.mxu0 %v879
  %1640 = vmatprep.subr.mxu0 %v882
  %1641 = vmatpush1.msra.mxu0 %v881
  %1642 = vmatprep.subr.mxu0 %v884
  %1643 = vmatpush1.msra.mxu0 %v883
  %1644 = vmatprep.subr.mxu0 %v886
  %1645 = vmatpush1.msra.mxu0 %v885
  %1646 = vmatprep.subr.mxu0 %v888
  %1647 = vmatpush1.msra.mxu0 %v887
  %1648 = vmatprep.subr.mxu0 %v890
  %1649 = vmatpush1.msra.mxu0 %v889
  %1650 = vmatprep.subr.mxu0 %v892
  %1651 = vmatpush1.msra.mxu0 %v891
  %1652 = vmatprep.mubr.f32.mxu0 %v398
  %1653 = vmatmul.mubr.f32.gmra.mrb[0].mxu0 %v397
  %v1654 = vpop.f32.mrb[0].mxu0
  %v1655 = vadd.f32 %v1422, %v1654
  %v1656 = vpop.f32.mrb[0].mxu0
  %v1657 = vadd.f32 %v1424, %v1656
  %1658 = vmatprep.mubr.f32.mxu0 %v409
  %1659 = vmatmul.mubr.f32.gmra.mrb[0].mxu0 %v408
  %v1660 = vpop.f32.mrb[0].mxu0
  %v1661 = vadd.f32 %v1428, %v1660
  %v1662 = vpop.f32.mrb[0].mxu0
  %v1663 = vadd.f32 %v1430, %v1662
  %1664 = vmatprep.mubr.f32.mxu0 %v420
  %1665 = vmatmul.mubr.f32.gmra.mrb[0].mxu0 %v419
  %v1666 = vpop.f32.mrb[0].mxu0
  %v1667 = vadd.f32 %v1434, %v1666
  %v1668 = vpop.f32.mrb[0].mxu0
  %v1669 = vadd.f32 %v1436, %v1668
  %1670 = vmatprep.mubr.f32.mxu0 %v431
  %1671 = vmatmul.mubr.f32.gmra.mrb[0].mxu0 %v430
  %v1672 = vpop.f32.mrb[0].mxu0
  %v1673 = vadd.f32 %v1440, %v1672
  %v1674 = vpop.f32.mrb[0].mxu0
  %v1675 = vadd.f32 %v1442, %v1674
  %1676 = vmatprep.mubr.f32.mxu0 %v442
  %1677 = vmatmul.mubr.f32.gmra.mrb[0].mxu0 %v441
  %v1678 = vpop.f32.mrb[0].mxu0
  %v1679 = vadd.f32 %v1446, %v1678
  %v1680 = vpop.f32.mrb[0].mxu0
  %v1681 = vadd.f32 %v1448, %v1680
  %1682 = vmatprep.mubr.f32.mxu0 %v453
  %1683 = vmatmul.mubr.f32.gmra.mrb[0].mxu0 %v452
  %v1684 = vpop.f32.mrb[0].mxu0
  %v1685 = vadd.f32 %v1452, %v1684
  %v1686 = vpop.f32.mrb[0].mxu0
  %v1687 = vadd.f32 %v1454, %v1686
  %1688 = vmatprep.mubr.f32.mxu0 %v464
  %1689 = vmatmul.mubr.f32.gmra.mrb[0].mxu0 %v463
  %v1690 = vpop.f32.mrb[0].mxu0
  %v1691 = vadd.f32 %v1458, %v1690
  %v1692 = vpop.f32.mrb[0].mxu0
  %v1693 = vadd.f32 %v1460, %v1692
  %1694 = vmatprep.mubr.f32.mxu0 %v475
  %1695 = vmatmul.mubr.f32.gmra.mrb[0].mxu0 %v474
  %v1696 = vpop.f32.mrb[0].mxu0
  %v1697 = vadd.f32 %v1464, %v1696
  %v1698 = vpop.f32.mrb[0].mxu0
  %v1699 = vadd.f32 %v1466, %v1698
  %1700 = vmatprep.mubr.f32.mxu0 %v486
  %1701 = vmatmul.mubr.f32.gmra.mrb[0].mxu0 %v485
  %v1702 = vpop.f32.mrb[0].mxu0
  %v1703 = vadd.f32 %v1470, %v1702
  %v1704 = vpop.f32.mrb[0].mxu0
  %v1705 = vadd.f32 %v1472, %v1704
  %1706 = vmatprep.mubr.f32.mxu0 %v497
  %1707 = vmatmul.mubr.f32.gmra.mrb[0].mxu0 %v496
  %v1708 = vpop.f32.mrb[0].mxu0
  %v1709 = vadd.f32 %v1476, %v1708
  %v1710 = vpop.f32.mrb[0].mxu0
  %v1711 = vadd.f32 %v1478, %v1710
  %1712 = vmatprep.mubr.f32.mxu0 %v508
  %1713 = vmatmul.mubr.f32.gmra.mrb[0].mxu0 %v507
  %v1714 = vpop.f32.mrb[0].mxu0
  %v1715 = vadd.f32 %v1482, %v1714
  %v1716 = vpop.f32.mrb[0].mxu0
  %v1717 = vadd.f32 %v1484, %v1716
  %1718 = vmatprep.mubr.f32.mxu0 %v519
  %1719 = vmatmul.mubr.f32.gmra.mrb[0].mxu0 %v518
  %v1720 = vpop.f32.mrb[0].mxu0
  %v1721 = vadd.f32 %v1488, %v1720
  %v1722 = vpop.f32.mrb[0].mxu0
  %v1723 = vadd.f32 %v1490, %v1722
  %1724 = vmatprep.mubr.f32.mxu0 %v530
  %1725 = vmatmul.mubr.f32.gmra.mrb[0].mxu0 %v529
  %v1726 = vpop.f32.mrb[0].mxu0
  %v1727 = vadd.f32 %v1494, %v1726
  %v1728 = vpop.f32.mrb[0].mxu0
  %v1729 = vadd.f32 %v1496, %v1728
  %1730 = vmatprep.mubr.f32.mxu0 %v541
  %1731 = vmatmul.mubr.f32.gmra.mrb[0].mxu0 %v540
  %v1732 = vpop.f32.mrb[0].mxu0
  %v1733 = vadd.f32 %v1500, %v1732
  %v1734 = vpop.f32.mrb[0].mxu0
  %v1735 = vadd.f32 %v1502, %v1734
  %1736 = vmatprep.mubr.f32.mxu0 %v552
  %1737 = vmatmul.mubr.f32.gmra.mrb[0].mxu0 %v551
  %v1738 = vpop.f32.mrb[0].mxu0
  %v1739 = vadd.f32 %v1506, %v1738
  %v1740 = vpop.f32.mrb[0].mxu0
  %v1741 = vadd.f32 %v1508, %v1740
  %1742 = vmatprep.mubr.f32.mxu0 %v563
  %1743 = vmatmul.mubr.f32.gmra.mrb[0].mxu0 %v562
  %v1744 = vpop.f32.mrb[0].mxu0
  %v1745 = vadd.f32 %v1512, %v1744
  %v1746 = vpop.f32.mrb[0].mxu0
  %v1747 = vadd.f32 %v1514, %v1746
  %1748 = vmatprep.mubr.f32.mxu0 %v574
  %1749 = vmatmul.mubr.f32.gmra.mrb[0].mxu0 %v573
  %v1750 = vpop.f32.mrb[0].mxu0
  %v1751 = vadd.f32 %v1518, %v1750
  %v1752 = vpop.f32.mrb[0].mxu0
  %v1753 = vadd.f32 %v1520, %v1752
  %1754 = vmatprep.mubr.f32.mxu0 %v585
  %1755 = vmatmul.mubr.f32.gmra.mrb[0].mxu0 %v584
  %v1756 = vpop.f32.mrb[0].mxu0
  %v1757 = vadd.f32 %v1524, %v1756
  %v1758 = vpop.f32.mrb[0].mxu0
  %v1759 = vadd.f32 %v1526, %v1758
  %1760 = vmatprep.mubr.f32.mxu0 %v596
  %1761 = vmatmul.mubr.f32.gmra.mrb[0].mxu0 %v595
  %v1762 = vpop.f32.mrb[0].mxu0
  %v1763 = vadd.f32 %v1530, %v1762
  %v1764 = vpop.f32.mrb[0].mxu0
  %v1765 = vadd.f32 %v1532, %v1764
  %1766 = vmatprep.mubr.f32.mxu0 %v607
  %1767 = vmatmul.mubr.f32.gmra.mrb[0].mxu0 %v606
  %v1768 = vpop.f32.mrb[0].mxu0
  %v1769 = vadd.f32 %v1536, %v1768
  %v1770 = vpop.f32.mrb[0].mxu0
  %v1771 = vadd.f32 %v1538, %v1770
  %1772 = vmatprep.mubr.f32.mxu0 %v618
  %1773 = vmatmul.mubr.f32.gmra.mrb[0].mxu0 %v617
  %v1774 = vpop.f32.mrb[0].mxu0
  %v1775 = vadd.f32 %v1542, %v1774
  %v1776 = vpop.f32.mrb[0].mxu0
  %v1777 = vadd.f32 %v1544, %v1776
  %1778 = vmatprep.mubr.f32.mxu0 %v629
  %1779 = vmatmul.mubr.f32.gmra.mrb[0].mxu0 %v628
  %v1780 = vpop.f32.mrb[0].mxu0
  %v1781 = vadd.f32 %v1548, %v1780
  %v1782 = vpop.f32.mrb[0].mxu0
  %v1783 = vadd.f32 %v1550, %v1782
  %1784 = vmatprep.mubr.f32.mxu0 %v640
  %1785 = vmatmul.mubr.f32.gmra.mrb[0].mxu0 %v639
  %v1786 = vpop.f32.mrb[0].mxu0
  %v1787 = vadd.f32 %v1554, %v1786
  %v1788 = vpop.f32.mrb[0].mxu0
  %v1789 = vadd.f32 %v1556, %v1788
  %1790 = vmatprep.mubr.f32.mxu0 %v651
  %1791 = vmatmul.mubr.f32.gmra.mrb[0].mxu0 %v650
  %v1792 = vpop.f32.mrb[0].mxu0
  %v1793 = vadd.f32 %v1560, %v1792
  %v1794 = vpop.f32.mrb[0].mxu0
  %v1795 = vadd.f32 %v1562, %v1794
  %1796 = vmatprep.mubr.f32.mxu0 %v662
  %1797 = vmatmul.mubr.f32.gmra.mrb[0].mxu0 %v661
  %v1798 = vpop.f32.mrb[0].mxu0
  %v1799 = vadd.f32 %v1566, %v1798
  %v1800 = vpop.f32.mrb[0].mxu0
  %v1801 = vadd.f32 %v1568, %v1800
  %1802 = vmatprep.mubr.f32.mxu0 %v673
  %1803 = vmatmul.mubr.f32.gmra.mrb[0].mxu0 %v672
  %v1804 = vpop.f32.mrb[0].mxu0
  %v1805 = vadd.f32 %v1572, %v1804
  %v1806 = vpop.f32.mrb[0].mxu0
  %v1807 = vadd.f32 %v1574, %v1806
  %1808 = vmatprep.mubr.f32.mxu0 %v684
  %1809 = vmatmul.mubr.f32.gmra.mrb[0].mxu0 %v683
  %v1810 = vpop.f32.mrb[0].mxu0
  %v1811 = vadd.f32 %v1578, %v1810
  %v1812 = vpop.f32.mrb[0].mxu0
  %v1813 = vadd.f32 %v1580, %v1812
  %1814 = vmatprep.mubr.f32.mxu0 %v695
  %1815 = vmatmul.mubr.f32.gmra.mrb[0].mxu0 %v694
  %v1816 = vpop.f32.mrb[0].mxu0
  %v1817 = vadd.f32 %v1584, %v1816
  %v1818 = vpop.f32.mrb[0].mxu0
  %v1819 = vadd.f32 %v1586, %v1818
  %1820 = vdwg.mxu0
  %1821 = vmatprep.subr.mxu0 %v894
  %1822 = vmatpush1.msra.mxu0 %v893
  %1823 = vmatprep.subr.mxu0 %v896
  %1824 = vmatpush1.msra.mxu0 %v895
  %1825 = vmatprep.subr.mxu0 %v898
  %1826 = vmatpush1.msra.mxu0 %v897
  %1827 = vmatprep.subr.mxu0 %v900
  %1828 = vmatpush1.msra.mxu0 %v899
  %1829 = vmatprep.subr.mxu0 %v902
  %1830 = vmatpush1.msra.mxu0 %v901
  %1831 = vmatprep.subr.mxu0 %v904
  %1832 = vmatpush1.msra.mxu0 %v903
  %1833 = vmatprep.subr.mxu0 %v906
  %1834 = vmatpush1.msra.mxu0 %v905
  %1835 = vmatprep.subr.mxu0 %v908
  %1836 = vmatpush1.msra.mxu0 %v907
  %1837 = vmatprep.subr.mxu0 %v910
  %1838 = vmatpush1.msra.mxu0 %v909
  %1839 = vmatprep.subr.mxu0 %v912
  %1840 = vmatpush1.msra.mxu0 %v911
  %1841 = vmatprep.subr.mxu0 %v914
  %1842 = vmatpush1.msra.mxu0 %v913
  %1843 = vmatprep.subr.mxu0 %v916
  %1844 = vmatpush1.msra.mxu0 %v915
  %1845 = vmatprep.subr.mxu0 %v918
  %1846 = vmatpush1.msra.mxu0 %v917
  %1847 = vmatprep.subr.mxu0 %v920
  %1848 = vmatpush1.msra.mxu0 %v919
  %1849 = vmatprep.subr.mxu0 %v922
  %1850 = vmatpush1.msra.mxu0 %v921
  %1851 = vmatprep.subr.mxu0 %v924
  %1852 = vmatpush1.msra.mxu0 %v923
  %1853 = vmatprep.subr.mxu0 %v926
  %1854 = vmatpush1.msra.mxu0 %v925
  %1855 = vmatprep.subr.mxu0 %v928
  %1856 = vmatpush1.msra.mxu0 %v927
  %1857 = vmatprep.subr.mxu0 %v930
  %1858 = vmatpush1.msra.mxu0 %v929
  %1859 = vmatprep.subr.mxu0 %v932
  %1860 = vmatpush1.msra.mxu0 %v931
  %1861 = vmatprep.subr.mxu0 %v934
  %1862 = vmatpush1.msra.mxu0 %v933
  %1863 = vmatprep.subr.mxu0 %v936
  %1864 = vmatpush1.msra.mxu0 %v935
  %1865 = vmatprep.subr.mxu0 %v938
  %1866 = vmatpush1.msra.mxu0 %v937
  %1867 = vmatprep.subr.mxu0 %v940
  %1868 = vmatpush1.msra.mxu0 %v939
  %1869 = vmatprep.subr.mxu0 %v942
  %1870 = vmatpush1.msra.mxu0 %v941
  %1871 = vmatprep.subr.mxu0 %v944
  %1872 = vmatpush1.msra.mxu0 %v943
  %1873 = vmatprep.subr.mxu0 %v946
  %1874 = vmatpush1.msra.mxu0 %v945
  %1875 = vmatprep.subr.mxu0 %v948
  %1876 = vmatpush1.msra.mxu0 %v947
  %1877 = vmatprep.subr.mxu0 %v950
  %1878 = vmatpush1.msra.mxu0 %v949
  %1879 = vmatprep.subr.mxu0 %v952
  %1880 = vmatpush1.msra.mxu0 %v951
  %1881 = vmatprep.subr.mxu0 %v954
  %1882 = vmatpush1.msra.mxu0 %v953
  %1883 = vmatprep.subr.mxu0 %v956
  %1884 = vmatpush1.msra.mxu0 %v955
  %1885 = vmatprep.mubr.f32.mxu0 %v400
  %1886 = vmatmul.mubr.f32.gmra.mrb[0].mxu0 %v399
  %v1887 = vpop.f32.mrb[0].mxu0
  %v1888 = vadd.f32 %v1655, %v1887
  %v1889 = vpop.f32.mrb[0].mxu0
  %v1890 = vadd.f32 %v1657, %v1889
  %1891 = vmatprep.mubr.f32.mxu0 %v411
  %1892 = vmatmul.mubr.f32.gmra.mrb[0].mxu0 %v410
  %v1893 = vpop.f32.mrb[0].mxu0
  %v1894 = vadd.f32 %v1661, %v1893
  %v1895 = vpop.f32.mrb[0].mxu0
  %v1896 = vadd.f32 %v1663, %v1895
  %1897 = vmatprep.mubr.f32.mxu0 %v422
  %1898 = vmatmul.mubr.f32.gmra.mrb[0].mxu0 %v421
  %v1899 = vpop.f32.mrb[0].mxu0
  %v1900 = vadd.f32 %v1667, %v1899
  %v1901 = vpop.f32.mrb[0].mxu0
  %v1902 = vadd.f32 %v1669, %v1901
  %1903 = vmatprep.mubr.f32.mxu0 %v433
  %1904 = vmatmul.mubr.f32.gmra.mrb[0].mxu0 %v432
  %v1905 = vpop.f32.mrb[0].mxu0
  %v1906 = vadd.f32 %v1673, %v1905
  %v1907 = vpop.f32.mrb[0].mxu0
  %v1908 = vadd.f32 %v1675, %v1907
  %1909 = vmatprep.mubr.f32.mxu0 %v444
  %1910 = vmatmul.mubr.f32.gmra.mrb[0].mxu0 %v443
  %v1911 = vpop.f32.mrb[0].mxu0
  %v1912 = vadd.f32 %v1679, %v1911
  %v1913 = vpop.f32.mrb[0].mxu0
  %v1914 = vadd.f32 %v1681, %v1913
  %1915 = vmatprep.mubr.f32.mxu0 %v455
  %1916 = vmatmul.mubr.f32.gmra.mrb[0].mxu0 %v454
  %v1917 = vpop.f32.mrb[0].mxu0
  %v1918 = vadd.f32 %v1685, %v1917
  %v1919 = vpop.f32.mrb[0].mxu0
  %v1920 = vadd.f32 %v1687, %v1919
  %1921 = vmatprep.mubr.f32.mxu0 %v466
  %1922 = vmatmul.mubr.f32.gmra.mrb[0].mxu0 %v465
  %v1923 = vpop.f32.mrb[0].mxu0
  %v1924 = vadd.f32 %v1691, %v1923
  %v1925 = vpop.f32.mrb[0].mxu0
  %v1926 = vadd.f32 %v1693, %v1925
  %1927 = vmatprep.mubr.f32.mxu0 %v477
  %1928 = vmatmul.mubr.f32.gmra.mrb[0].mxu0 %v476
  %v1929 = vpop.f32.mrb[0].mxu0
  %v1930 = vadd.f32 %v1697, %v1929
  %v1931 = vpop.f32.mrb[0].mxu0
  %v1932 = vadd.f32 %v1699, %v1931
  %1933 = vmatprep.mubr.f32.mxu0 %v488
  %1934 = vmatmul.mubr.f32.gmra.mrb[0].mxu0 %v487
  %v1935 = vpop.f32.mrb[0].mxu0
  %v1936 = vadd.f32 %v1703, %v1935
  %v1937 = vpop.f32.mrb[0].mxu0
  %v1938 = vadd.f32 %v1705, %v1937
  %1939 = vmatprep.mubr.f32.mxu0 %v499
  %1940 = vmatmul.mubr.f32.gmra.mrb[0].mxu0 %v498
  %v1941 = vpop.f32.mrb[0].mxu0
  %v1942 = vadd.f32 %v1709, %v1941
  %v1943 = vpop.f32.mrb[0].mxu0
  %v1944 = vadd.f32 %v1711, %v1943
  %1945 = vmatprep.mubr.f32.mxu0 %v510
  %1946 = vmatmul.mubr.f32.gmra.mrb[0].mxu0 %v509
  %v1947 = vpop.f32.mrb[0].mxu0
  %v1948 = vadd.f32 %v1715, %v1947
  %v1949 = vpop.f32.mrb[0].mxu0
  %v1950 = vadd.f32 %v1717, %v1949
  %1951 = vmatprep.mubr.f32.mxu0 %v521
  %1952 = vmatmul.mubr.f32.gmra.mrb[0].mxu0 %v520
  %v1953 = vpop.f32.mrb[0].mxu0
  %v1954 = vadd.f32 %v1721, %v1953
  %v1955 = vpop.f32.mrb[0].mxu0
  %v1956 = vadd.f32 %v1723, %v1955
  %1957 = vmatprep.mubr.f32.mxu0 %v532
  %1958 = vmatmul.mubr.f32.gmra.mrb[0].mxu0 %v531
  %v1959 = vpop.f32.mrb[0].mxu0
  %v1960 = vadd.f32 %v1727, %v1959
  %v1961 = vpop.f32.mrb[0].mxu0
  %v1962 = vadd.f32 %v1729, %v1961
  %1963 = vmatprep.mubr.f32.mxu0 %v543
  %1964 = vmatmul.mubr.f32.gmra.mrb[0].mxu0 %v542
  %v1965 = vpop.f32.mrb[0].mxu0
  %v1966 = vadd.f32 %v1733, %v1965
  %v1967 = vpop.f32.mrb[0].mxu0
  %v1968 = vadd.f32 %v1735, %v1967
  %1969 = vmatprep.mubr.f32.mxu0 %v554
  %1970 = vmatmul.mubr.f32.gmra.mrb[0].mxu0 %v553
  %v1971 = vpop.f32.mrb[0].mxu0
  %v1972 = vadd.f32 %v1739, %v1971
  %v1973 = vpop.f32.mrb[0].mxu0
  %v1974 = vadd.f32 %v1741, %v1973
  %1975 = vmatprep.mubr.f32.mxu0 %v565
  %1976 = vmatmul.mubr.f32.gmra.mrb[0].mxu0 %v564
  %v1977 = vpop.f32.mrb[0].mxu0
  %v1978 = vadd.f32 %v1745, %v1977
  %v1979 = vpop.f32.mrb[0].mxu0
  %v1980 = vadd.f32 %v1747, %v1979
  %1981 = vmatprep.mubr.f32.mxu0 %v576
  %1982 = vmatmul.mubr.f32.gmra.mrb[0].mxu0 %v575
  %v1983 = vpop.f32.mrb[0].mxu0
  %v1984 = vadd.f32 %v1751, %v1983
  %v1985 = vpop.f32.mrb[0].mxu0
  %v1986 = vadd.f32 %v1753, %v1985
  %1987 = vmatprep.mubr.f32.mxu0 %v587
  %1988 = vmatmul.mubr.f32.gmra.mrb[0].mxu0 %v586
  %v1989 = vpop.f32.mrb[0].mxu0
  %v1990 = vadd.f32 %v1757, %v1989
  %v1991 = vpop.f32.mrb[0].mxu0
  %v1992 = vadd.f32 %v1759, %v1991
  %1993 = vmatprep.mubr.f32.mxu0 %v598
  %1994 = vmatmul.mubr.f32.gmra.mrb[0].mxu0 %v597
  %v1995 = vpop.f32.mrb[0].mxu0
  %v1996 = vadd.f32 %v1763, %v1995
  %v1997 = vpop.f32.mrb[0].mxu0
  %v1998 = vadd.f32 %v1765, %v1997
  %1999 = vmatprep.mubr.f32.mxu0 %v609
  %2000 = vmatmul.mubr.f32.gmra.mrb[0].mxu0 %v608
  %v2001 = vpop.f32.mrb[0].mxu0
  %v2002 = vadd.f32 %v1769, %v2001
  %v2003 = vpop.f32.mrb[0].mxu0
  %v2004 = vadd.f32 %v1771, %v2003
  %2005 = vmatprep.mubr.f32.mxu0 %v620
  %2006 = vmatmul.mubr.f32.gmra.mrb[0].mxu0 %v619
  %v2007 = vpop.f32.mrb[0].mxu0
  %v2008 = vadd.f32 %v1775, %v2007
  %v2009 = vpop.f32.mrb[0].mxu0
  %v2010 = vadd.f32 %v1777, %v2009
  %2011 = vmatprep.mubr.f32.mxu0 %v631
  %2012 = vmatmul.mubr.f32.gmra.mrb[0].mxu0 %v630
  %v2013 = vpop.f32.mrb[0].mxu0
  %v2014 = vadd.f32 %v1781, %v2013
  %v2015 = vpop.f32.mrb[0].mxu0
  %v2016 = vadd.f32 %v1783, %v2015
  %2017 = vmatprep.mubr.f32.mxu0 %v642
  %2018 = vmatmul.mubr.f32.gmra.mrb[0].mxu0 %v641
  %v2019 = vpop.f32.mrb[0].mxu0
  %v2020 = vadd.f32 %v1787, %v2019
  %v2021 = vpop.f32.mrb[0].mxu0
  %v2022 = vadd.f32 %v1789, %v2021
  %2023 = vmatprep.mubr.f32.mxu0 %v653
  %2024 = vmatmul.mubr.f32.gmra.mrb[0].mxu0 %v652
  %v2025 = vpop.f32.mrb[0].mxu0
  %v2026 = vadd.f32 %v1793, %v2025
  %v2027 = vpop.f32.mrb[0].mxu0
  %v2028 = vadd.f32 %v1795, %v2027
  %2029 = vmatprep.mubr.f32.mxu0 %v664
  %2030 = vmatmul.mubr.f32.gmra.mrb[0].mxu0 %v663
  %v2031 = vpop.f32.mrb[0].mxu0
  %v2032 = vadd.f32 %v1799, %v2031
  %v2033 = vpop.f32.mrb[0].mxu0
  %v2034 = vadd.f32 %v1801, %v2033
  %2035 = vmatprep.mubr.f32.mxu0 %v675
  %2036 = vmatmul.mubr.f32.gmra.mrb[0].mxu0 %v674
  %v2037 = vpop.f32.mrb[0].mxu0
  %v2038 = vadd.f32 %v1805, %v2037
  %v2039 = vpop.f32.mrb[0].mxu0
  %v2040 = vadd.f32 %v1807, %v2039
  %2041 = vmatprep.mubr.f32.mxu0 %v686
  %2042 = vmatmul.mubr.f32.gmra.mrb[0].mxu0 %v685
  %v2043 = vpop.f32.mrb[0].mxu0
  %v2044 = vadd.f32 %v1811, %v2043
  %v2045 = vpop.f32.mrb[0].mxu0
  %v2046 = vadd.f32 %v1813, %v2045
  %2047 = vmatprep.mubr.f32.mxu0 %v697
  %2048 = vmatmul.mubr.f32.gmra.mrb[0].mxu0 %v696
  %v2049 = vpop.f32.mrb[0].mxu0
  %v2050 = vadd.f32 %v1817, %v2049
  %v2051 = vpop.f32.mrb[0].mxu0
  %v2052 = vadd.f32 %v1819, %v2051
  %2053 = vdwg.mxu0
  %2054 = vmatprep.subr.mxu0 %v958
  %2055 = vmatpush1.msra.mxu0 %v957
  %2056 = vmatprep.subr.mxu0 %v960
  %2057 = vmatpush1.msra.mxu0 %v959
  %2058 = vmatprep.subr.mxu0 %v962
  %2059 = vmatpush1.msra.mxu0 %v961
  %2060 = vmatprep.subr.mxu0 %v964
  %2061 = vmatpush1.msra.mxu0 %v963
  %2062 = vmatprep.subr.mxu0 %v966
  %2063 = vmatpush1.msra.mxu0 %v965
  %2064 = vmatprep.subr.mxu0 %v968
  %2065 = vmatpush1.msra.mxu0 %v967
  %2066 = vmatprep.subr.mxu0 %v970
  %2067 = vmatpush1.msra.mxu0 %v969
  %2068 = vmatprep.subr.mxu0 %v972
  %2069 = vmatpush1.msra.mxu0 %v971
  %2070 = vmatprep.subr.mxu0 %v974
  %2071 = vmatpush1.msra.mxu0 %v973
  %2072 = vmatprep.subr.mxu0 %v976
  %2073 = vmatpush1.msra.mxu0 %v975
  %2074 = vmatprep.subr.mxu0 %v978
  %2075 = vmatpush1.msra.mxu0 %v977
  %2076 = vmatprep.subr.mxu0 %v980
  %2077 = vmatpush1.msra.mxu0 %v979
  %2078 = vmatprep.subr.mxu0 %v982
  %2079 = vmatpush1.msra.mxu0 %v981
  %2080 = vmatprep.subr.mxu0 %v984
  %2081 = vmatpush1.msra.mxu0 %v983
  %2082 = vmatprep.subr.mxu0 %v986
  %2083 = vmatpush1.msra.mxu0 %v985
  %2084 = vmatprep.subr.mxu0 %v988
  %2085 = vmatpush1.msra.mxu0 %v987
  %2086 = vmatprep.subr.mxu0 %v990
  %2087 = vmatpush1.msra.mxu0 %v989
  %2088 = vmatprep.subr.mxu0 %v992
  %2089 = vmatpush1.msra.mxu0 %v991
  %2090 = vmatprep.subr.mxu0 %v994
  %2091 = vmatpush1.msra.mxu0 %v993
  %2092 = vmatprep.subr.mxu0 %v996
  %2093 = vmatpush1.msra.mxu0 %v995
  %2094 = vmatprep.subr.mxu0 %v998
  %2095 = vmatpush1.msra.mxu0 %v997
  %2096 = vmatprep.subr.mxu0 %v1000
  %2097 = vmatpush1.msra.mxu0 %v999
  %2098 = vmatprep.subr.mxu0 %v1002
  %2099 = vmatpush1.msra.mxu0 %v1001
  %2100 = vmatprep.subr.mxu0 %v1004
  %2101 = vmatpush1.msra.mxu0 %v1003
  %2102 = vmatprep.subr.mxu0 %v1006
  %2103 = vmatpush1.msra.mxu0 %v1005
  %2104 = vmatprep.subr.mxu0 %v1008
  %2105 = vmatpush1.msra.mxu0 %v1007
  %2106 = vmatprep.subr.mxu0 %v1010
  %2107 = vmatpush1.msra.mxu0 %v1009
  %2108 = vmatprep.subr.mxu0 %v1012
  %2109 = vmatpush1.msra.mxu0 %v1011
  %2110 = vmatprep.subr.mxu0 %v1014
  %2111 = vmatpush1.msra.mxu0 %v1013
  %2112 = vmatprep.subr.mxu0 %v1016
  %2113 = vmatpush1.msra.mxu0 %v1015
  %2114 = vmatprep.subr.mxu0 %v1018
  %2115 = vmatpush1.msra.mxu0 %v1017
  %2116 = vmatprep.subr.mxu0 %v1020
  %2117 = vmatpush1.msra.mxu0 %v1019
  %2118 = vmatprep.mubr.f32.mxu0 %v402
  %2119 = vmatmul.mubr.f32.gmra.mrb[0].mxu0 %v401
  %v2120 = vpop.f32.mrb[0].mxu0
  %v2121 = vadd.f32 %v1888, %v2120
  %v2122 = vpop.f32.mrb[0].mxu0
  %v2123 = vadd.f32 %v1890, %v2122
  %2124 = vmatprep.mubr.f32.mxu0 %v413
  %2125 = vmatmul.mubr.f32.gmra.mrb[0].mxu0 %v412
  %v2126 = vpop.f32.mrb[0].mxu0
  %v2127 = vadd.f32 %v1894, %v2126
  %v2128 = vpop.f32.mrb[0].mxu0
  %v2129 = vadd.f32 %v1896, %v2128
  %2130 = vmatprep.mubr.f32.mxu0 %v424
  %2131 = vmatmul.mubr.f32.gmra.mrb[0].mxu0 %v423
  %v2132 = vpop.f32.mrb[0].mxu0
  %v2133 = vadd.f32 %v1900, %v2132
  %v2134 = vpop.f32.mrb[0].mxu0
  %v2135 = vadd.f32 %v1902, %v2134
  %2136 = vmatprep.mubr.f32.mxu0 %v435
  %2137 = vmatmul.mubr.f32.gmra.mrb[0].mxu0 %v434
  %v2138 = vpop.f32.mrb[0].mxu0
  %v2139 = vadd.f32 %v1906, %v2138
  %v2140 = vpop.f32.mrb[0].mxu0
  %v2141 = vadd.f32 %v1908, %v2140
  %2142 = vmatprep.mubr.f32.mxu0 %v446
  %2143 = vmatmul.mubr.f32.gmra.mrb[0].mxu0 %v445
  %v2144 = vpop.f32.mrb[0].mxu0
  %v2145 = vadd.f32 %v1912, %v2144
  %v2146 = vpop.f32.mrb[0].mxu0
  %v2147 = vadd.f32 %v1914, %v2146
  %2148 = vmatprep.mubr.f32.mxu0 %v457
  %2149 = vmatmul.mubr.f32.gmra.mrb[0].mxu0 %v456
  %v2150 = vpop.f32.mrb[0].mxu0
  %v2151 = vadd.f32 %v1918, %v2150
  %v2152 = vpop.f32.mrb[0].mxu0
  %v2153 = vadd.f32 %v1920, %v2152
  %2154 = vmatprep.mubr.f32.mxu0 %v468
  %2155 = vmatmul.mubr.f32.gmra.mrb[0].mxu0 %v467
  %v2156 = vpop.f32.mrb[0].mxu0
  %v2157 = vadd.f32 %v1924, %v2156
  %v2158 = vpop.f32.mrb[0].mxu0
  %v2159 = vadd.f32 %v1926, %v2158
  %2160 = vmatprep.mubr.f32.mxu0 %v479
  %2161 = vmatmul.mubr.f32.gmra.mrb[0].mxu0 %v478
  %v2162 = vpop.f32.mrb[0].mxu0
  %v2163 = vadd.f32 %v1930, %v2162
  %v2164 = vpop.f32.mrb[0].mxu0
  %v2165 = vadd.f32 %v1932, %v2164
  %2166 = vmatprep.mubr.f32.mxu0 %v490
  %2167 = vmatmul.mubr.f32.gmra.mrb[0].mxu0 %v489
  %v2168 = vpop.f32.mrb[0].mxu0
  %v2169 = vadd.f32 %v1936, %v2168
  %v2170 = vpop.f32.mrb[0].mxu0
  %v2171 = vadd.f32 %v1938, %v2170
  %2172 = vmatprep.mubr.f32.mxu0 %v501
  %2173 = vmatmul.mubr.f32.gmra.mrb[0].mxu0 %v500
  %v2174 = vpop.f32.mrb[0].mxu0
  %v2175 = vadd.f32 %v1942, %v2174
  %v2176 = vpop.f32.mrb[0].mxu0
  %v2177 = vadd.f32 %v1944, %v2176
  %2178 = vmatprep.mubr.f32.mxu0 %v512
  %2179 = vmatmul.mubr.f32.gmra.mrb[0].mxu0 %v511
  %v2180 = vpop.f32.mrb[0].mxu0
  %v2181 = vadd.f32 %v1948, %v2180
  %v2182 = vpop.f32.mrb[0].mxu0
  %v2183 = vadd.f32 %v1950, %v2182
  %2184 = vmatprep.mubr.f32.mxu0 %v523
  %2185 = vmatmul.mubr.f32.gmra.mrb[0].mxu0 %v522
  %v2186 = vpop.f32.mrb[0].mxu0
  %v2187 = vadd.f32 %v1954, %v2186
  %v2188 = vpop.f32.mrb[0].mxu0
  %v2189 = vadd.f32 %v1956, %v2188
  %2190 = vmatprep.mubr.f32.mxu0 %v534
  %2191 = vmatmul.mubr.f32.gmra.mrb[0].mxu0 %v533
  %v2192 = vpop.f32.mrb[0].mxu0
  %v2193 = vadd.f32 %v1960, %v2192
  %v2194 = vpop.f32.mrb[0].mxu0
  %v2195 = vadd.f32 %v1962, %v2194
  %2196 = vmatprep.mubr.f32.mxu0 %v545
  %2197 = vmatmul.mubr.f32.gmra.mrb[0].mxu0 %v544
  %v2198 = vpop.f32.mrb[0].mxu0
  %v2199 = vadd.f32 %v1966, %v2198
  %v2200 = vpop.f32.mrb[0].mxu0
  %v2201 = vadd.f32 %v1968, %v2200
  %2202 = vmatprep.mubr.f32.mxu0 %v556
  %2203 = vmatmul.mubr.f32.gmra.mrb[0].mxu0 %v555
  %v2204 = vpop.f32.mrb[0].mxu0
  %v2205 = vadd.f32 %v1972, %v2204
  %v2206 = vpop.f32.mrb[0].mxu0
  %v2207 = vadd.f32 %v1974, %v2206
  %2208 = vmatprep.mubr.f32.mxu0 %v567
  %2209 = vmatmul.mubr.f32.gmra.mrb[0].mxu0 %v566
  %v2210 = vpop.f32.mrb[0].mxu0
  %v2211 = vadd.f32 %v1978, %v2210
  %v2212 = vpop.f32.mrb[0].mxu0
  %v2213 = vadd.f32 %v1980, %v2212
  %2214 = vmatprep.mubr.f32.mxu0 %v578
  %2215 = vmatmul.mubr.f32.gmra.mrb[0].mxu0 %v577
  %v2216 = vpop.f32.mrb[0].mxu0
  %v2217 = vadd.f32 %v1984, %v2216
  %v2218 = vpop.f32.mrb[0].mxu0
  %v2219 = vadd.f32 %v1986, %v2218
  %2220 = vmatprep.mubr.f32.mxu0 %v589
  %2221 = vmatmul.mubr.f32.gmra.mrb[0].mxu0 %v588
  %v2222 = vpop.f32.mrb[0].mxu0
  %v2223 = vadd.f32 %v1990, %v2222
  %v2224 = vpop.f32.mrb[0].mxu0
  %v2225 = vadd.f32 %v1992, %v2224
  %2226 = vmatprep.mubr.f32.mxu0 %v600
  %2227 = vmatmul.mubr.f32.gmra.mrb[0].mxu0 %v599
  %v2228 = vpop.f32.mrb[0].mxu0
  %v2229 = vadd.f32 %v1996, %v2228
  %v2230 = vpop.f32.mrb[0].mxu0
  %v2231 = vadd.f32 %v1998, %v2230
  %2232 = vmatprep.mubr.f32.mxu0 %v611
  %2233 = vmatmul.mubr.f32.gmra.mrb[0].mxu0 %v610
  %v2234 = vpop.f32.mrb[0].mxu0
  %v2235 = vadd.f32 %v2002, %v2234
  %v2236 = vpop.f32.mrb[0].mxu0
  %v2237 = vadd.f32 %v2004, %v2236
  %2238 = vmatprep.mubr.f32.mxu0 %v622
  %2239 = vmatmul.mubr.f32.gmra.mrb[0].mxu0 %v621
  %v2240 = vpop.f32.mrb[0].mxu0
  %v2241 = vadd.f32 %v2008, %v2240
  %v2242 = vpop.f32.mrb[0].mxu0
  %v2243 = vadd.f32 %v2010, %v2242
  %2244 = vmatprep.mubr.f32.mxu0 %v633
  %2245 = vmatmul.mubr.f32.gmra.mrb[0].mxu0 %v632
  %v2246 = vpop.f32.mrb[0].mxu0
  %v2247 = vadd.f32 %v2014, %v2246
  %v2248 = vpop.f32.mrb[0].mxu0
  %v2249 = vadd.f32 %v2016, %v2248
  %2250 = vmatprep.mubr.f32.mxu0 %v644
  %2251 = vmatmul.mubr.f32.gmra.mrb[0].mxu0 %v643
  %v2252 = vpop.f32.mrb[0].mxu0
  %v2253 = vadd.f32 %v2020, %v2252
  %v2254 = vpop.f32.mrb[0].mxu0
  %v2255 = vadd.f32 %v2022, %v2254
  %2256 = vmatprep.mubr.f32.mxu0 %v655
  %2257 = vmatmul.mubr.f32.gmra.mrb[0].mxu0 %v654
  %v2258 = vpop.f32.mrb[0].mxu0
  %v2259 = vadd.f32 %v2026, %v2258
  %v2260 = vpop.f32.mrb[0].mxu0
  %v2261 = vadd.f32 %v2028, %v2260
  %2262 = vmatprep.mubr.f32.mxu0 %v666
  %2263 = vmatmul.mubr.f32.gmra.mrb[0].mxu0 %v665
  %v2264 = vpop.f32.mrb[0].mxu0
  %v2265 = vadd.f32 %v2032, %v2264
  %v2266 = vpop.f32.mrb[0].mxu0
  %v2267 = vadd.f32 %v2034, %v2266
  %2268 = vmatprep.mubr.f32.mxu0 %v677
  %2269 = vmatmul.mubr.f32.gmra.mrb[0].mxu0 %v676
  %v2270 = vpop.f32.mrb[0].mxu0
  %v2271 = vadd.f32 %v2038, %v2270
  %v2272 = vpop.f32.mrb[0].mxu0
  %v2273 = vadd.f32 %v2040, %v2272
  %2274 = vmatprep.mubr.f32.mxu0 %v688
  %2275 = vmatmul.mubr.f32.gmra.mrb[0].mxu0 %v687
  %v2276 = vpop.f32.mrb[0].mxu0
  %v2277 = vadd.f32 %v2044, %v2276
  %v2278 = vpop.f32.mrb[0].mxu0
  %v2279 = vadd.f32 %v2046, %v2278
  %2280 = vmatprep.mubr.f32.mxu0 %v699
  %2281 = vmatmul.mubr.f32.gmra.mrb[0].mxu0 %v698
  %v2282 = vpop.f32.mrb[0].mxu0
  %v2283 = vadd.f32 %v2050, %v2282
  %v2284 = vpop.f32.mrb[0].mxu0
  %v2285 = vadd.f32 %v2052, %v2284
  %2286 = vdwg.mxu0
  %2287 = vmatprep.subr.mxu0 %v1022
  %2288 = vmatpush1.msra.mxu0 %v1021
  %2289 = vmatprep.subr.mxu0 %v1024
  %2290 = vmatpush1.msra.mxu0 %v1023
  %2291 = vmatprep.subr.mxu0 %v1026
  %2292 = vmatpush1.msra.mxu0 %v1025
  %2293 = vmatprep.subr.mxu0 %v1028
  %2294 = vmatpush1.msra.mxu0 %v1027
  %2295 = vmatprep.subr.mxu0 %v1030
  %2296 = vmatpush1.msra.mxu0 %v1029
  %2297 = vmatprep.subr.mxu0 %v1032
  %2298 = vmatpush1.msra.mxu0 %v1031
  %2299 = vmatprep.subr.mxu0 %v1034
  %2300 = vmatpush1.msra.mxu0 %v1033
  %2301 = vmatprep.subr.mxu0 %v1036
  %2302 = vmatpush1.msra.mxu0 %v1035
  %2303 = vmatprep.subr.mxu0 0.0
  %2304 = vmatpush1.msra.mxu0 0.0
  %2305 = vmatprep.subr.mxu0 0.0
  %2306 = vmatpush1.msra.mxu0 0.0
  %2307 = vmatprep.subr.mxu0 0.0
  %2308 = vmatpush1.msra.mxu0 0.0
  %2309 = vmatprep.subr.mxu0 0.0
  %2310 = vmatpush1.msra.mxu0 0.0
  %2311 = vmatprep.subr.mxu0 0.0
  %2312 = vmatpush1.msra.mxu0 0.0
  %2313 = vmatprep.subr.mxu0 0.0
  %2314 = vmatpush1.msra.mxu0 0.0
  %2315 = vmatprep.subr.mxu0 0.0
  %2316 = vmatpush1.msra.mxu0 0.0
  %2317 = vmatprep.subr.mxu0 0.0
  %2318 = vmatpush1.msra.mxu0 0.0
  %2319 = vmatprep.subr.mxu0 0.0
  %2320 = vmatpush1.msra.mxu0 0.0
  %2321 = vmatprep.subr.mxu0 0.0
  %2322 = vmatpush1.msra.mxu0 0.0
  %2323 = vmatprep.subr.mxu0 0.0
  %2324 = vmatpush1.msra.mxu0 0.0
  %2325 = vmatprep.subr.mxu0 0.0
  %2326 = vmatpush1.msra.mxu0 0.0
  %2327 = vmatprep.subr.mxu0 0.0
  %2328 = vmatpush1.msra.mxu0 0.0
  %2329 = vmatprep.subr.mxu0 0.0
  %2330 = vmatpush1.msra.mxu0 0.0
  %2331 = vmatprep.subr.mxu0 0.0
  %2332 = vmatpush1.msra.mxu0 0.0
  %2333 = vmatprep.subr.mxu0 0.0
  %2334 = vmatpush1.msra.mxu0 0.0
  %2335 = vmatprep.subr.mxu0 0.0
  %2336 = vmatpush1.msra.mxu0 0.0
  %2337 = vmatprep.subr.mxu0 0.0
  %2338 = vmatpush1.msra.mxu0 0.0
  %2339 = vmatprep.subr.mxu0 0.0
  %2340 = vmatpush1.msra.mxu0 0.0
  %2341 = vmatprep.subr.mxu0 0.0
  %2342 = vmatpush1.msra.mxu0 0.0
  %2343 = vmatprep.subr.mxu0 0.0
  %2344 = vmatpush1.msra.mxu0 0.0
  %2345 = vmatprep.subr.mxu0 0.0
  %2346 = vmatpush1.msra.mxu0 0.0
  %2347 = vmatprep.subr.mxu0 0.0
  %2348 = vmatpush1.msra.mxu0 0.0
  %2349 = vmatprep.subr.mxu0 0.0
  %2350 = vmatpush1.msra.mxu0 0.0
  %2351 = vmatprep.mubr.f32.mxu0 0.0
  %2352 = vmatmul.mubr.f32.gmra.mrb[0].mxu0 %v1039
  %v2353 = vpop.f32.mrb[0].mxu0
  %v2354 = vadd.f32 %v2121, %v2353
  %v2355 = vpop.f32.mrb[0].mxu0
  %v2356 = vadd.f32 %v2123, %v2355
  %2357 = vmatprep.mubr.f32.mxu0 0.0
  %2358 = vmatmul.mubr.f32.gmra.mrb[0].mxu0 %v1042
  %v2359 = vpop.f32.mrb[0].mxu0
  %v2360 = vadd.f32 %v2127, %v2359
  %v2361 = vpop.f32.mrb[0].mxu0
  %v2362 = vadd.f32 %v2129, %v2361
  %2363 = vmatprep.mubr.f32.mxu0 0.0
  %2364 = vmatmul.mubr.f32.gmra.mrb[0].mxu0 %v1045
  %v2365 = vpop.f32.mrb[0].mxu0
  %v2366 = vadd.f32 %v2133, %v2365
  %v2367 = vpop.f32.mrb[0].mxu0
  %v2368 = vadd.f32 %v2135, %v2367
  %2369 = vmatprep.mubr.f32.mxu0 0.0
  %2370 = vmatmul.mubr.f32.gmra.mrb[0].mxu0 %v1048
  %v2371 = vpop.f32.mrb[0].mxu0
  %v2372 = vadd.f32 %v2139, %v2371
  %v2373 = vpop.f32.mrb[0].mxu0
  %v2374 = vadd.f32 %v2141, %v2373
  %2375 = vmatprep.mubr.f32.mxu0 0.0
  %2376 = vmatmul.mubr.f32.gmra.mrb[0].mxu0 %v1051
  %v2377 = vpop.f32.mrb[0].mxu0
  %v2378 = vadd.f32 %v2145, %v2377
  %v2379 = vpop.f32.mrb[0].mxu0
  %v2380 = vadd.f32 %v2147, %v2379
  %2381 = vmatprep.mubr.f32.mxu0 0.0
  %2382 = vmatmul.mubr.f32.gmra.mrb[0].mxu0 %v1054
  %v2383 = vpop.f32.mrb[0].mxu0
  %v2384 = vadd.f32 %v2151, %v2383
  %v2385 = vpop.f32.mrb[0].mxu0
  %v2386 = vadd.f32 %v2153, %v2385
  %2387 = vmatprep.mubr.f32.mxu0 0.0
  %2388 = vmatmul.mubr.f32.gmra.mrb[0].mxu0 %v1057
  %v2389 = vpop.f32.mrb[0].mxu0
  %v2390 = vadd.f32 %v2157, %v2389
  %v2391 = vpop.f32.mrb[0].mxu0
  %v2392 = vadd.f32 %v2159, %v2391
  %2393 = vmatprep.mubr.f32.mxu0 0.0
  %2394 = vmatmul.mubr.f32.gmra.mrb[0].mxu0 %v1060
  %v2395 = vpop.f32.mrb[0].mxu0
  %v2396 = vadd.f32 %v2163, %v2395
  %v2397 = vpop.f32.mrb[0].mxu0
  %v2398 = vadd.f32 %v2165, %v2397
  %2399 = vmatprep.mubr.f32.mxu0 0.0
  %2400 = vmatmul.mubr.f32.gmra.mrb[0].mxu0 %v1063
  %v2401 = vpop.f32.mrb[0].mxu0
  %v2402 = vadd.f32 %v2169, %v2401
  %v2403 = vpop.f32.mrb[0].mxu0
  %v2404 = vadd.f32 %v2171, %v2403
  %2405 = vmatprep.mubr.f32.mxu0 0.0
  %2406 = vmatmul.mubr.f32.gmra.mrb[0].mxu0 %v1066
  %v2407 = vpop.f32.mrb[0].mxu0
  %v2408 = vadd.f32 %v2175, %v2407
  %v2409 = vpop.f32.mrb[0].mxu0
  %v2410 = vadd.f32 %v2177, %v2409
  %2411 = vmatprep.mubr.f32.mxu0 0.0
  %2412 = vmatmul.mubr.f32.gmra.mrb[0].mxu0 %v1069
  %v2413 = vpop.f32.mrb[0].mxu0
  %v2414 = vadd.f32 %v2181, %v2413
  %v2415 = vpop.f32.mrb[0].mxu0
  %v2416 = vadd.f32 %v2183, %v2415
  %2417 = vmatprep.mubr.f32.mxu0 0.0
  %2418 = vmatmul.mubr.f32.gmra.mrb[0].mxu0 %v1072
  %v2419 = vpop.f32.mrb[0].mxu0
  %v2420 = vadd.f32 %v2187, %v2419
  %v2421 = vpop.f32.mrb[0].mxu0
  %v2422 = vadd.f32 %v2189, %v2421
  %2423 = vmatprep.mubr.f32.mxu0 0.0
  %2424 = vmatmul.mubr.f32.gmra.mrb[0].mxu0 %v1075
  %v2425 = vpop.f32.mrb[0].mxu0
  %v2426 = vadd.f32 %v2193, %v2425
  %v2427 = vpop.f32.mrb[0].mxu0
  %v2428 = vadd.f32 %v2195, %v2427
  %2429 = vmatprep.mubr.f32.mxu0 0.0
  %2430 = vmatmul.mubr.f32.gmra.mrb[0].mxu0 %v1078
  %v2431 = vpop.f32.mrb[0].mxu0
  %v2432 = vadd.f32 %v2199, %v2431
  %v2433 = vpop.f32.mrb[0].mxu0
  %v2434 = vadd.f32 %v2201, %v2433
  %2435 = vmatprep.mubr.f32.mxu0 0.0
  %2436 = vmatmul.mubr.f32.gmra.mrb[0].mxu0 %v1081
  %v2437 = vpop.f32.mrb[0].mxu0
  %v2438 = vadd.f32 %v2205, %v2437
  %v2439 = vpop.f32.mrb[0].mxu0
  %v2440 = vadd.f32 %v2207, %v2439
  %2441 = vmatprep.mubr.f32.mxu0 0.0
  %2442 = vmatmul.mubr.f32.gmra.mrb[0].mxu0 %v1084
  %v2443 = vpop.f32.mrb[0].mxu0
  %v2444 = vadd.f32 %v2211, %v2443
  %v2445 = vpop.f32.mrb[0].mxu0
  %v2446 = vadd.f32 %v2213, %v2445
  %2447 = vmatprep.mubr.f32.mxu0 0.0
  %2448 = vmatmul.mubr.f32.gmra.mrb[0].mxu0 %v1087
  %v2449 = vpop.f32.mrb[0].mxu0
  %v2450 = vadd.f32 %v2217, %v2449
  %v2451 = vpop.f32.mrb[0].mxu0
  %v2452 = vadd.f32 %v2219, %v2451
  %2453 = vmatprep.mubr.f32.mxu0 0.0
  %2454 = vmatmul.mubr.f32.gmra.mrb[0].mxu0 %v1090
  %v2455 = vpop.f32.mrb[0].mxu0
  %v2456 = vadd.f32 %v2223, %v2455
  %v2457 = vpop.f32.mrb[0].mxu0
  %v2458 = vadd.f32 %v2225, %v2457
  %2459 = vmatprep.mubr.f32.mxu0 0.0
  %2460 = vmatmul.mubr.f32.gmra.mrb[0].mxu0 %v1093
  %v2461 = vpop.f32.mrb[0].mxu0
  %v2462 = vadd.f32 %v2229, %v2461
  %v2463 = vpop.f32.mrb[0].mxu0
  %v2464 = vadd.f32 %v2231, %v2463
  %2465 = vmatprep.mubr.f32.mxu0 0.0
  %2466 = vmatmul.mubr.f32.gmra.mrb[0].mxu0 %v1096
  %v2467 = vpop.f32.mrb[0].mxu0
  %v2468 = vadd.f32 %v2235, %v2467
  %v2469 = vpop.f32.mrb[0].mxu0
  %v2470 = vadd.f32 %v2237, %v2469
  %2471 = vmatprep.mubr.f32.mxu0 0.0
  %2472 = vmatmul.mubr.f32.gmra.mrb[0].mxu0 %v1099
  %v2473 = vpop.f32.mrb[0].mxu0
  %v2474 = vadd.f32 %v2241, %v2473
  %v2475 = vpop.f32.mrb[0].mxu0
  %v2476 = vadd.f32 %v2243, %v2475
  %2477 = vmatprep.mubr.f32.mxu0 0.0
  %2478 = vmatmul.mubr.f32.gmra.mrb[0].mxu0 %v1102
  %v2479 = vpop.f32.mrb[0].mxu0
  %v2480 = vadd.f32 %v2247, %v2479
  %v2481 = vpop.f32.mrb[0].mxu0
  %v2482 = vadd.f32 %v2249, %v2481
  %2483 = vmatprep.mubr.f32.mxu0 0.0
  %2484 = vmatmul.mubr.f32.gmra.mrb[0].mxu0 %v1105
  %v2485 = vpop.f32.mrb[0].mxu0
  %v2486 = vadd.f32 %v2253, %v2485
  %v2487 = vpop.f32.mrb[0].mxu0
  %v2488 = vadd.f32 %v2255, %v2487
  %2489 = vmatprep.mubr.f32.mxu0 0.0
  %2490 = vmatmul.mubr.f32.gmra.mrb[0].mxu0 %v1108
  %v2491 = vpop.f32.mrb[0].mxu0
  %v2492 = vadd.f32 %v2259, %v2491
  %v2493 = vpop.f32.mrb[0].mxu0
  %v2494 = vadd.f32 %v2261, %v2493
  %2495 = vmatprep.mubr.f32.mxu0 0.0
  %2496 = vmatmul.mubr.f32.gmra.mrb[0].mxu0 %v1111
  %v2497 = vpop.f32.mrb[0].mxu0
  %v2498 = vadd.f32 %v2265, %v2497
  %v2499 = vpop.f32.mrb[0].mxu0
  %v2500 = vadd.f32 %v2267, %v2499
  %2501 = vmatprep.mubr.f32.mxu0 0.0
  %2502 = vmatmul.mubr.f32.gmra.mrb[0].mxu0 %v1114
  %v2503 = vpop.f32.mrb[0].mxu0
  %v2504 = vadd.f32 %v2271, %v2503
  %v2505 = vpop.f32.mrb[0].mxu0
  %v2506 = vadd.f32 %v2273, %v2505
  %2507 = vmatprep.mubr.f32.mxu0 0.0
  %2508 = vmatmul.mubr.f32.gmra.mrb[0].mxu0 %v1117
  %v2509 = vpop.f32.mrb[0].mxu0
  %v2510 = vadd.f32 %v2277, %v2509
  %v2511 = vpop.f32.mrb[0].mxu0
  %v2512 = vadd.f32 %v2279, %v2511
  %2513 = vmatprep.mubr.f32.mxu0 0.0
  %2514 = vmatmul.mubr.f32.gmra.mrb[0].mxu0 %v1120
  %v2515 = vpop.f32.mrb[0].mxu0
  %v2516 = vadd.f32 %v2283, %v2515
  %v2517 = vpop.f32.mrb[0].mxu0
  %v2518 = vadd.f32 %v2285, %v2517
  %2519 = vdwg.mxu0
  %2520 = vst [vmem:[%s3] sm:$0xff] %v2354
  %vm2521 = vcmask 556032
  %2522 = vst.msk [vmem:[%s3 + $0x8] sm:$0xff] %vm2521, %v2356
  %2523 = vst [vmem:[%s3 + $0x10] sm:$0xff] %v2360
  %2524 = vst.msk [vmem:[%s3 + $0x18] sm:$0xff] %vm2521, %v2362
  %2525 = vst [vmem:[%s3 + $0x20] sm:$0xff] %v2366
  %2526 = vst.msk [vmem:[%s3 + $0x28] sm:$0xff] %vm2521, %v2368
  %2527 = vst [vmem:[%s3 + $0x30] sm:$0xff] %v2372
  %2528 = vst.msk [vmem:[%s3 + $0x38] sm:$0xff] %vm2521, %v2374
  %2529 = vst [vmem:[%s3 + $0x40] sm:$0xff] %v2378
  %2530 = vst.msk [vmem:[%s3 + $0x48] sm:$0xff] %vm2521, %v2380
  %2531 = vst [vmem:[%s3 + $0x50] sm:$0xff] %v2384
  %2532 = vst.msk [vmem:[%s3 + $0x58] sm:$0xff] %vm2521, %v2386
  %2533 = vst [vmem:[%s3 + $0x60] sm:$0xff] %v2390
  %2534 = vst.msk [vmem:[%s3 + $0x68] sm:$0xff] %vm2521, %v2392
  %2535 = vst [vmem:[%s3 + $0x70] sm:$0xff] %v2396
  %2536 = vst.msk [vmem:[%s3 + $0x78] sm:$0xff] %vm2521, %v2398
  %2537 = vst [vmem:[%s3 + $0x80] sm:$0xff] %v2402
  %2538 = vst.msk [vmem:[%s3 + $0x88] sm:$0xff] %vm2521, %v2404
  %2539 = vst [vmem:[%s3 + $0x90] sm:$0xff] %v2408
  %2540 = vst.msk [vmem:[%s3 + $0x98] sm:$0xff] %vm2521, %v2410
  %2541 = vst [vmem:[%s3 + $0xa0] sm:$0xff] %v2414
  %2542 = vst.msk [vmem:[%s3 + $0xa8] sm:$0xff] %vm2521, %v2416
  %2543 = vst [vmem:[%s3 + $0xb0] sm:$0xff] %v2420
  %2544 = vst.msk [vmem:[%s3 + $0xb8] sm:$0xff] %vm2521, %v2422
  %2545 = vst [vmem:[%s3 + $0xc0] sm:$0xff] %v2426
  %2546 = vst.msk [vmem:[%s3 + $0xc8] sm:$0xff] %vm2521, %v2428
  %2547 = vst [vmem:[%s3 + $0xd0] sm:$0xff] %v2432
  %2548 = vst.msk [vmem:[%s3 + $0xd8] sm:$0xff] %vm2521, %v2434
  %2549 = vst [vmem:[%s3 + $0xe0] sm:$0xff] %v2438
  %2550 = vst.msk [vmem:[%s3 + $0xe8] sm:$0xff] %vm2521, %v2440
  %2551 = vst [vmem:[%s3 + $0xf0] sm:$0xff] %v2444
  %2552 = vst.msk [vmem:[%s3 + $0xf8] sm:$0xff] %vm2521, %v2446
  %2553 = vst [vmem:[%s3 + $0x100] sm:$0xff] %v2450
  %2554 = vst.msk [vmem:[%s3 + $0x108] sm:$0xff] %vm2521, %v2452
  %2555 = vst [vmem:[%s3 + $0x110] sm:$0xff] %v2456
  %2556 = vst.msk [vmem:[%s3 + $0x118] sm:$0xff] %vm2521, %v2458
  %2557 = vst [vmem:[%s3 + $0x120] sm:$0xff] %v2462
  %2558 = vst.msk [vmem:[%s3 + $0x128] sm:$0xff] %vm2521, %v2464
  %2559 = vst [vmem:[%s3 + $0x130] sm:$0xff] %v2468
  %2560 = vst.msk [vmem:[%s3 + $0x138] sm:$0xff] %vm2521, %v2470
  %2561 = vst [vmem:[%s3 + $0x140] sm:$0xff] %v2474
  %2562 = vst.msk [vmem:[%s3 + $0x148] sm:$0xff] %vm2521, %v2476
  %2563 = vst [vmem:[%s3 + $0x150] sm:$0xff] %v2480
  %2564 = vst.msk [vmem:[%s3 + $0x158] sm:$0xff] %vm2521, %v2482
  %2565 = vst [vmem:[%s3 + $0x160] sm:$0xff] %v2486
  %2566 = vst.msk [vmem:[%s3 + $0x168] sm:$0xff] %vm2521, %v2488
  %2567 = vst [vmem:[%s3 + $0x170] sm:$0xff] %v2492
  %2568 = vst.msk [vmem:[%s3 + $0x178] sm:$0xff] %vm2521, %v2494
  %2569 = vst [vmem:[%s3 + $0x180] sm:$0xff] %v2498
  %2570 = vst.msk [vmem:[%s3 + $0x188] sm:$0xff] %vm2521, %v2500
  %2571 = vst [vmem:[%s3 + $0x190] sm:$0xff] %v2504
  %2572 = vst.msk [vmem:[%s3 + $0x198] sm:$0xff] %vm2521, %v2506
  %2573 = vst [vmem:[%s3 + $0x1a0] sm:$0xff] %v2510
  %2574 = vst.msk [vmem:[%s3 + $0x1a8] sm:$0xff] %vm2521, %v2512
  %2575 = vst [vmem:[%s3 + $0x1b0] sm:$0xff] %v2516
  %2576 = vst.msk [vmem:[%s3 + $0x1b8] sm:$0xff] %vm2521, %v2518
  // Predicated region
  $region14: #{tpu_custom_call.1} parent=0 // pred_check
    _
  $region15: #{tpu_custom_call.1} parent=0 // pred_check_branch
    %2578 = sbr.rel (0) target = $region17
  $region16: #{tpu_custom_call.1} parent=0 // pred_region
    _
  $region17: #{tpu_custom_call.1} parent=0 // pred_fallthru
    _
  // Predicated region
  $region18: #{tpu_custom_call.1} parent=0 // pred_check
    _
  $region19: #{tpu_custom_call.1} parent=0 // pred_check_branch
    %2580 = sbr.rel (0) target = $region21
  $region20: #{tpu_custom_call.1} parent=0 // pred_region
    _
  $region21: #{tpu_custom_call.1} parent=0 // pred_fallthru
    _

</llo_original>
